<compile_context>
chip_gen: v7x
topology: tpu7x:2x2x1
jax: 0.10.0
libtpu: 0.0.40
codegen_flags: <defaults>
</compile_context>

<pallas_src>
import functools

import jax
import jax.numpy as jnp
from jax import lax
from jax.experimental import pallas as pl
from jax.experimental.pallas import tpu as pltpu

EPS = 1e-5
LANE = 128


def _round_up(n, m):
    return ((n + m - 1) // m) * m


def _pad_to(a, shape):
    pads = [(0, t - s) for s, t in zip(a.shape, shape)]
    if all(p == (0, 0) for p in pads):
        return a
    return jnp.pad(a, pads)


def _est_vmem_bytes(tq, tk, cp, cip, io_bytes):
    """Rough per-kernel VMEM footprint (bytes) for the chosen tiles."""
    bf, f4, dbl = 2, 4, 2
    tiles = dbl * (tq * cip * bf          # theta tile
                   + 2 * tk * cip * bf    # phi + g tiles
                   + tq * cp * io_bytes   # residual x tile
                   + tq * cp * io_bytes)  # output tile
    weights = cip * cp * bf + 4 * cp * f4          # ww + bw/scale/shift (1-buffered)
    scratch = tq * cip * f4 + 2 * tq * f4          # acc + m + l
    temps = 4 * tq * tk * f4                       # logits / p / mask headroom
    return tiles + weights + scratch + temps


def _plan_tiles(n, batch, cp, cip, io_bytes, *, tq_pref, tk_pref, align):
    """Pick aligned (tq, tk), the padded sequence length and a VMEM limit."""
    cap = _round_up(n, align)
    tq = min(_round_up(tq_pref, align), cap)
    tk = min(_round_up(tk_pref, align), cap)

    budget = 56 * 2**20  # headroom under v7x's 64 MiB physical VMEM
    while _est_vmem_bytes(tq, tk, cp, cip, io_bytes) > budget and tk > align:
        tk //= 2
    while _est_vmem_bytes(tq, tk, cp, cip, io_bytes) > budget and tq > align:
        tq //= 2

    np_ = _round_up(n, max(tq, tk))

    # v7x has 2 TensorCores: make sure the "parallel" (b, qi) axes give both work.
    while batch * (np_ // tq) < 2 and tq > align and (tq // 2) % align == 0:
        tq //= 2

    assert np_ % tq == 0 and np_ % tk == 0
    vmem_limit = int(min(max(1.5 * _est_vmem_bytes(tq, tk, cp, cip, io_bytes),
                             32 * 2**20), 60 * 2**20))
    return tq, tk, np_, vmem_limit


def _flash_kernel(
    theta_ref,             # (1, TQ, Cip) bf16
    phi_ref,               # (1, TK, Cip) bf16
    g_ref,                 # (1, TK, Cip) bf16
    xq_ref,                # (1, TQ, Cp)  residual tile (x dtype)
    ww_ref,                # (Cip, Cp)    bf16, W 1x1 conv
    bw_ref,                # (1, Cp)      f32
    scale_ref, shift_ref,  # (1, Cp)      f32, folded eval-mode BN
    o_ref,                 # (1, TQ, Cp)
    m_sc, l_sc,            # (TQ, 1)  f32 scratch (running max / sum)
    acc_sc,                # (TQ, Cip) f32 scratch (output accumulator)
    *, tk, n_valid, mask_keys,
):
    ki = pl.program_id(2)

    @pl.when(ki == 0)
    def _init():
        m_sc[...] = jnp.full_like(m_sc, -jnp.inf)
        l_sc[...] = jnp.zeros_like(l_sc)
        acc_sc[...] = jnp.zeros_like(acc_sc)

    # logits = theta @ phi^T, contracting the Ci axes directly (no transpose).
    # bf16 operands, f32 MXU accumulation.
    logits = lax.dot_general(
        theta_ref[0], phi_ref[0],
        dimension_numbers=(((1,), (1,)), ((), ())),
        preferred_element_type=jnp.float32,
    )
    if mask_keys:
        # N was padded to a tile multiple in the wrapper; mask padded keys.
        col = lax.broadcasted_iota(jnp.int32, logits.shape, 1)
        logits = jnp.where(ki * tk + col < n_valid, logits, -jnp.inf)

    # Online softmax update (f32).
    m_prev = m_sc[...]
    m_new = jnp.maximum(m_prev, jnp.max(logits, axis=-1, keepdims=True))
    alpha = jnp.exp(m_prev - m_new)
    p = jnp.exp(logits - m_new)
    l_sc[...] = alpha * l_sc[...] + jnp.sum(p, axis=-1, keepdims=True)
    acc_sc[...] = alpha * acc_sc[...] + jnp.dot(
        p.astype(jnp.bfloat16), g_ref[0], preferred_element_type=jnp.float32)
    m_sc[...] = m_new

    @pl.when(ki == pl.num_programs(2) - 1)
    def _finalize():
        # Normalize once on the (TQ, Ci) accumulator, never on (TQ, TK).
        y = acc_sc[...] * pl.reciprocal(l_sc[...], approx=False)
        # 1x1 conv (Ci -> C) + folded eval-mode BatchNorm + residual.
        wy = jnp.dot(y.astype(jnp.bfloat16), ww_ref[...],
                     preferred_element_type=jnp.float32) + bw_ref[...]
        wy = wy * scale_ref[...] + shift_ref[...]
        o_ref[0] = (xq_ref[0].astype(jnp.float32) + wy).astype(o_ref.dtype)


def nonlocal_block(x_nchw, params, *, tq_pref=512, tk_pref=256, align=256):
    """Eval-mode NonLocalBlock forward. x_nchw: (B, C, H, W). Returns same shape."""
    B, C, H, W = x_nchw.shape
    N = H * W
    Ci = params["wt"].shape[1]

    Cp = _round_up(C, LANE)
    Cip = _round_up(Ci, LANE)
    io_bytes = jnp.dtype(x_nchw.dtype).itemsize

    tq, tk, Np, vmem_limit = _plan_tiles(
        N, B, Cp, Cip, io_bytes, tq_pref=tq_pref, tk_pref=tk_pref, align=align)
    nq, nk = Np // tq, Np // tk

    # TODO(synk): accept channels-last input to drop this HBM transpose pass.
    xf = jnp.transpose(x_nchw.reshape(B, C, N), (0, 2, 1))         # (B, N, C)

    f32, bf16 = jnp.float32, jnp.bfloat16
    x_bf = xf.astype(bf16)

    def proj(w, b):  # 1x1 conv == channels-last matmul; bf16 MXU, f32 accum
        return jnp.dot(x_bf, w.astype(bf16), preferred_element_type=f32) + b.astype(f32)

    # theta / phi / g projected once per image here (not per kv tile in-kernel).
    theta = _pad_to(proj(params["wt"], params["bt"]), (B, Np, Cip)).astype(bf16)
    phi = _pad_to(proj(params["wp"], params["bp"]), (B, Np, Cip)).astype(bf16)
    g = _pad_to(proj(params["wg"], params["bg"]), (B, Np, Cip)).astype(bf16)
    xq = _pad_to(xf, (B, Np, Cp))                                   # residual

    ww = _pad_to(params["ww"].astype(f32), (Cip, Cp)).astype(bf16)
    bw = _pad_to(params["bw"].astype(f32), (1, Cp))
    # Fold eval-mode BatchNorm into per-channel scale/shift.
    bn_scale = params["gamma"] * lax.rsqrt(params["var"] + EPS)
    bn_shift = params["beta"] - params["mean"] * bn_scale
    bn_scale = _pad_to(bn_scale.astype(f32), (1, Cp))
    bn_shift = _pad_to(bn_shift.astype(f32), (1, Cp))

    def const_spec(shape):
        # Constant index map -> the second pipeline buffer is never used.
        return pl.BlockSpec(shape, lambda b, qi, ki: (0,) * len(shape),
                            pipeline_mode=pl.Buffered(1))

    kernel = functools.partial(_flash_kernel, tk=tk, n_valid=N,
                               mask_keys=(Np != N))

    out_flat = pl.pallas_call(
        kernel,
        out_shape=jax.ShapeDtypeStruct((B, Np, Cp), x_nchw.dtype),
        grid_spec=pltpu.PrefetchScalarGridSpec(
            num_scalar_prefetch=0,
            grid=(B, nq, nk),
            in_specs=[
                pl.BlockSpec((1, tq, Cip), lambda b, qi, ki: (b, qi, 0)),  # theta
                pl.BlockSpec((1, tk, Cip), lambda b, qi, ki: (b, ki, 0)),  # phi
                pl.BlockSpec((1, tk, Cip), lambda b, qi, ki: (b, ki, 0)),  # g
                pl.BlockSpec((1, tq, Cp), lambda b, qi, ki: (b, qi, 0)),   # x residual
                const_spec((Cip, Cp)), const_spec((1, Cp)),                # W conv
                const_spec((1, Cp)), const_spec((1, Cp)),                  # folded BN
            ],
            out_specs=pl.BlockSpec((1, tq, Cp), lambda b, qi, ki: (b, qi, 0)),
            scratch_shapes=[
                pltpu.VMEM((tq, 1), jnp.float32),     # running max
                pltpu.VMEM((tq, 1), jnp.float32),     # running sum
                pltpu.VMEM((tq, Cip), jnp.float32),   # output accumulator
            ],
        ),
        compiler_params=pltpu.CompilerParams(
            dimension_semantics=("parallel", "parallel", "arbitrary"),
            vmem_limit_bytes=vmem_limit,
        ),
    )(theta, phi, g, xq, ww, bw, bn_scale, bn_shift)

    out = out_flat[:, :N, :C]
    return jnp.transpose(out, (0, 2, 1)).reshape(B, C, H, W)


def _reference(x_nchw, params):
    """Pure-JAX f32 reference mirroring the PyTorch forward (eval-mode BN)."""
    B, C, H, W = x_nchw.shape
    N = H * W
    xf = jnp.transpose(x_nchw.reshape(B, C, N), (0, 2, 1))          # (B, N, C)
    theta = xf @ params["wt"] + params["bt"]
    phi = xf @ params["wp"] + params["bp"]
    g = xf @ params["wg"] + params["bg"]
    attn = jax.nn.softmax(jnp.einsum("bnc,bmc->bnm", theta, phi), axis=-1)
    y = jnp.einsum("bnm,bmc->bnc", attn, g)
    wy = y @ params["ww"] + params["bw"]
    wy = (wy - params["mean"]) * lax.rsqrt(params["var"] + EPS) * params["gamma"] + params["beta"]
    out = xf + wy
    return jnp.transpose(out, (0, 2, 1)).reshape(B, C, H, W)


def make_params(key, C, reduction=2):
    Ci = C // reduction
    ks = jax.random.split(key, 12)
    scale = 0.1
    return {
        # conv weights stored transposed for x @ W:  (C_in, C_out)
        "wt": jax.random.normal(ks[0], (C, Ci), jnp.float32) * scale,
        "bt": jax.random.normal(ks[1], (1, Ci), jnp.float32) * scale,
        "wp": jax.random.normal(ks[2], (C, Ci), jnp.float32) * scale,
        "bp": jax.random.normal(ks[3], (1, Ci), jnp.float32) * scale,
        "wg": jax.random.normal(ks[4], (C, Ci), jnp.float32) * scale,
        "bg": jax.random.normal(ks[5], (1, Ci), jnp.float32) * scale,
        "ww": jax.random.normal(ks[6], (Ci, C), jnp.float32) * scale,
        "bw": jax.random.normal(ks[7], (1, C), jnp.float32) * scale,
        # Eval-mode BN params; the PyTorch module initializes gamma=beta=0
        # (W_y == 0 right after construction) but the test uses nonzero values
        # so the attention / conv path is actually validated.
        "gamma": 1.0 + scale * jax.random.normal(ks[8], (1, C), jnp.float32),
        "beta": scale * jax.random.normal(ks[9], (1, C), jnp.float32),
        "mean": scale * jax.random.normal(ks[10], (1, C), jnp.float32),
        "var": 1.0 + scale * jax.random.uniform(ks[11], (1, C), jnp.float32),
    }


if __name__ == "__main__":
    key = jax.random.PRNGKey(0)
    k1, k2, k3, k4 = jax.random.split(key, 4)

    # Test 1: multi-tile online-softmax path (N=256 with 128-sized tiles ->
    # nq = nk = 2, running m/l/acc and init/finalize actually exercised).
    B, C, H, W = 2, 4, 16, 16
    x = jax.random.normal(k1, (B, C, H, W), jnp.float32)
    params = make_params(k2, C, reduction=2)
    out = jax.block_until_ready(
        nonlocal_block(x, params, tq_pref=128, tk_pref=128, align=128))
    ref = _reference(x, params)
    assert out.shape == (B, C, H, W)
    err1 = float(jnp.max(jnp.abs(out - ref)))
    # bf16 MXU operands -> flash-attention-level bf16 tolerance.
    assert jnp.allclose(out, ref, atol=3e-2, rtol=3e-2), f"test1 max err {err1}"

    # Test 2: N = 100 (not tile-aligned) -> padded keys masked to -inf.
    B2, C2, H2, W2 = 1, 8, 10, 10
    x2 = jax.random.normal(k3, (B2, C2, H2, W2), jnp.float32)
    params2 = make_params(k4, C2, reduction=2)
    out2 = jax.block_until_ready(nonlocal_block(x2, params2))
    ref2 = _reference(x2, params2)
    assert out2.shape == (B2, C2, H2, W2)
    err2 = float(jnp.max(jnp.abs(out2 - ref2)))
    assert jnp.allclose(out2, ref2, atol=3e-2, rtol=3e-2), f"test2 max err {err2}"

    print("KERNEL_OK")
</pallas_src>

<mosaic_0001>
module attributes {stable_mosaic.version = 11 : i64} {
  func.func @_flash_kernel(%arg0: i32, %arg1: i32, %arg2: i32, %arg3: memref<1x128x128xbf16, #tpu.memory_space<vmem>>, %arg4: memref<1x128x128xbf16, #tpu.memory_space<vmem>>, %arg5: memref<1x128x128xbf16, #tpu.memory_space<vmem>>, %arg6: memref<1x128x128xf32, #tpu.memory_space<vmem>>, %arg7: memref<128x128xbf16, #tpu.memory_space<vmem>>, %arg8: memref<1x128xf32, #tpu.memory_space<vmem>>, %arg9: memref<1x128xf32, #tpu.memory_space<vmem>>, %arg10: memref<1x128xf32, #tpu.memory_space<vmem>>, %arg11: memref<1x128x128xf32, #tpu.memory_space<vmem>>, %arg12: memref<128x1xf32, #tpu.memory_space<vmem>>, %arg13: memref<128x1xf32, #tpu.memory_space<vmem>>, %arg14: memref<128x128xf32, #tpu.memory_space<vmem>>) attributes {dimension_semantics = [#tpu.dimension_semantics<parallel>, #tpu.dimension_semantics<parallel>, #tpu.dimension_semantics<arbitrary>], iteration_bounds = array<i64: 2, 2, 2>, scalar_prefetch = 0 : i64, scratch_operands = 3 : i64, tpu.core_type = #tpu.core_type<tc>, window_params = [{transform_indices = @transform_0, window_bounds = array<i64: 1, 128, 128>}, {transform_indices = @transform_1, window_bounds = array<i64: 1, 128, 128>}, {transform_indices = @transform_2, window_bounds = array<i64: 1, 128, 128>}, {transform_indices = @transform_3, window_bounds = array<i64: 1, 128, 128>}, {pipeline_mode = #tpu.pipeline_mode<synchronous>, transform_indices = @transform_4, window_bounds = array<i64: 128, 128>}, {pipeline_mode = #tpu.pipeline_mode<synchronous>, transform_indices = @transform_5, window_bounds = array<i64: 1, 128>}, {pipeline_mode = #tpu.pipeline_mode<synchronous>, transform_indices = @transform_6, window_bounds = array<i64: 1, 128>}, {pipeline_mode = #tpu.pipeline_mode<synchronous>, transform_indices = @transform_7, window_bounds = array<i64: 1, 128>}, {transform_indices = @transform_8, window_bounds = array<i64: 1, 128, 128>}]} {
    %c0_i32 = arith.constant 0 : i32
    %0 = arith.cmpi eq, %arg2, %c0_i32 : i32
    %1 = arith.extui %0 : i1 to i32
    %c0_i32_0 = arith.constant 0 : i32
    %2 = arith.cmpi ne, %1, %c0_i32_0 : i32
    scf.if %2 {
      %cst_25 = arith.constant 0xFF800000 : f32
      %36 = vector.broadcast %cst_25 : f32 to vector<128x1xf32>
      %c0_26 = arith.constant 0 : index
      %c0_27 = arith.constant 0 : index
      %37 = vector.load %arg12[%c0_26, %c0_27] : memref<128x1xf32, #tpu.memory_space<vmem>>, vector<128x1xf32>
      tpu.vector_store %arg12[%c0_26, %c0_27], %36 {strides = array<i32>} : memref<128x1xf32, #tpu.memory_space<vmem>>, vector<128x1xf32>,
      %cst_28 = arith.constant 0.000000e+00 : f32
      %38 = vector.broadcast %cst_28 : f32 to vector<128x1xf32>
      %c0_29 = arith.constant 0 : index
      %c0_30 = arith.constant 0 : index
      %39 = vector.load %arg13[%c0_29, %c0_30] : memref<128x1xf32, #tpu.memory_space<vmem>>, vector<128x1xf32>
      tpu.vector_store %arg13[%c0_29, %c0_30], %38 {strides = array<i32>} : memref<128x1xf32, #tpu.memory_space<vmem>>, vector<128x1xf32>,
      %cst_31 = arith.constant 0.000000e+00 : f32
      %40 = vector.broadcast %cst_31 : f32 to vector<128x128xf32>
      %c0_32 = arith.constant 0 : index
      %c0_33 = arith.constant 0 : index
      %41 = vector.load %arg14[%c0_32, %c0_33] : memref<128x128xf32, #tpu.memory_space<vmem>>, vector<128x128xf32>
      tpu.vector_store %arg14[%c0_32, %c0_33], %40 {strides = array<i32>} : memref<128x128xf32, #tpu.memory_space<vmem>>, vector<128x128xf32>,
    } else {
    }
    %c0 = arith.constant 0 : index
    %c0_1 = arith.constant 0 : index
    %c0_2 = arith.constant 0 : index
    %3 = vector.load %arg3[%c0, %c0_1, %c0_2] : memref<1x128x128xbf16, #tpu.memory_space<vmem>>, vector<1x128x128xbf16>
    %4 = vector.shape_cast %3 : vector<1x128x128xbf16> to vector<128x128xbf16>
    %c0_3 = arith.constant 0 : index
    %c0_4 = arith.constant 0 : index
    %c0_5 = arith.constant 0 : index
    %5 = vector.load %arg4[%c0_3, %c0_4, %c0_5] : memref<1x128x128xbf16, #tpu.memory_space<vmem>>, vector<1x128x128xbf16>
    %6 = vector.shape_cast %5 : vector<1x128x128xbf16> to vector<128x128xbf16>
    %cst = arith.constant dense<0.000000e+00> : vector<128x128xf32>
    %7 = tpu.matmul %4, %6, %cst {dimension_numbers = #tpu.dot_dimension_numbers<[1], [1], [0], [0], [0, 0, 1, 0], [], []>} : vector<128x128xbf16>, vector<128x128xbf16>, vector<128x128xf32> -> vector<128x128xf32>
    %c0_6 = arith.constant 0 : index
    %c0_7 = arith.constant 0 : index
    %8 = vector.load %arg12[%c0_6, %c0_7] : memref<128x1xf32, #tpu.memory_space<vmem>>, vector<128x1xf32>
    %cst_8 = arith.constant dense<0xFF800000> : vector<128xf32>
    %9 = vector.multi_reduction <maximumf>, %7, %cst_8 [1] : vector<128x128xf32> to vector<128xf32>
    %10 = vector.shape_cast %9 : vector<128xf32> to vector<128x1xf32>
    %11 = arith.maximumf %8, %10 : vector<128x1xf32>
    %12 = arith.subf %8, %11 : vector<128x1xf32>
    %13 = math.exp %12 : vector<128x1xf32>
    %14 = vector.broadcast %11 : vector<128x1xf32> to vector<128x128xf32>
    %15 = arith.subf %7, %14 : vector<128x128xf32>
    %16 = math.exp %15 : vector<128x128xf32>
    %c0_9 = arith.constant 0 : index
    %c0_10 = arith.constant 0 : index
    %17 = vector.load %arg13[%c0_9, %c0_10] : memref<128x1xf32, #tpu.memory_space<vmem>>, vector<128x1xf32>
    %18 = arith.mulf %13, %17 : vector<128x1xf32>
    %cst_11 = arith.constant dense<0.000000e+00> : vector<128xf32>
    %19 = vector.multi_reduction <add>, %16, %cst_11 [1] : vector<128x128xf32> to vector<128xf32>
    %20 = vector.shape_cast %19 : vector<128xf32> to vector<128x1xf32>
    %21 = arith.addf %18, %20 : vector<128x1xf32>
    %c0_12 = arith.constant 0 : index
    %c0_13 = arith.constant 0 : index
    %22 = vector.load %arg13[%c0_12, %c0_13] : memref<128x1xf32, #tpu.memory_space<vmem>>, vector<128x1xf32>
    tpu.vector_store %arg13[%c0_12, %c0_13], %21 {strides = array<i32>} : memref<128x1xf32, #tpu.memory_space<vmem>>, vector<128x1xf32>,
    %c0_14 = arith.constant 0 : index
    %c0_15 = arith.constant 0 : index
    %23 = vector.load %arg14[%c0_14, %c0_15] : memref<128x128xf32, #tpu.memory_space<vmem>>, vector<128x128xf32>
    %24 = vector.broadcast %13 : vector<128x1xf32> to vector<128x128xf32>
    %25 = arith.mulf %24, %23 : vector<128x128xf32>
    %26 = arith.truncf %16 : vector<128x128xf32> to vector<128x128xbf16>
    %c0_16 = arith.constant 0 : index
    %c0_17 = arith.constant 0 : index
    %c0_18 = arith.constant 0 : index
    %27 = vector.load %arg5[%c0_16, %c0_17, %c0_18] : memref<1x128x128xbf16, #tpu.memory_space<vmem>>, vector<1x128x128xbf16>
    %28 = vector.shape_cast %27 : vector<1x128x128xbf16> to vector<128x128xbf16>
    %cst_19 = arith.constant dense<0.000000e+00> : vector<128x128xf32>
    %29 = tpu.matmul %26, %28, %cst_19 {dimension_numbers = #tpu.dot_dimension_numbers<[1], [0], [0], [1], [0, 0, 1, 1], [], []>} : vector<128x128xbf16>, vector<128x128xbf16>, vector<128x128xf32> -> vector<128x128xf32>
    %30 = arith.addf %25, %29 : vector<128x128xf32>
    %c0_20 = arith.constant 0 : index
    %c0_21 = arith.constant 0 : index
    %31 = vector.load %arg14[%c0_20, %c0_21] : memref<128x128xf32, #tpu.memory_space<vmem>>, vector<128x128xf32>
    tpu.vector_store %arg14[%c0_20, %c0_21], %30 {strides = array<i32>} : memref<128x128xf32, #tpu.memory_space<vmem>>, vector<128x128xf32>,
    %c0_22 = arith.constant 0 : index
    %c0_23 = arith.constant 0 : index
    %32 = vector.load %arg12[%c0_22, %c0_23] : memref<128x1xf32, #tpu.memory_space<vmem>>, vector<128x1xf32>
    tpu.vector_store %arg12[%c0_22, %c0_23], %11 {strides = array<i32>} : memref<128x1xf32, #tpu.memory_space<vmem>>, vector<128x1xf32>,
    %c1_i32 = arith.constant 1 : i32
    %33 = arith.cmpi eq, %arg2, %c1_i32 : i32
    %34 = arith.extui %33 : i1 to i32
    %c0_i32_24 = arith.constant 0 : i32
    %35 = arith.cmpi ne, %34, %c0_i32_24 : i32
    scf.if %35 {
      %c0_25 = arith.constant 0 : index
      %c0_26 = arith.constant 0 : index
      %36 = vector.load %arg14[%c0_25, %c0_26] : memref<128x128xf32, #tpu.memory_space<vmem>>, vector<128x128xf32>
      %c0_27 = arith.constant 0 : index
      %c0_28 = arith.constant 0 : index
      %37 = vector.load %arg13[%c0_27, %c0_28] : memref<128x1xf32, #tpu.memory_space<vmem>>, vector<128x1xf32>
      %38 = tpu.reciprocal %37 : vector<128x1xf32> -> vector<128x1xf32>
      %39 = vector.broadcast %38 : vector<128x1xf32> to vector<128x128xf32>
      %40 = arith.mulf %36, %39 : vector<128x128xf32>
      %41 = arith.truncf %40 : vector<128x128xf32> to vector<128x128xbf16>
      %c0_29 = arith.constant 0 : index
      %c0_30 = arith.constant 0 : index
      %42 = vector.load %arg7[%c0_29, %c0_30] : memref<128x128xbf16, #tpu.memory_space<vmem>>, vector<128x128xbf16>
      %cst_31 = arith.constant dense<0.000000e+00> : vector<128x128xf32>
      %43 = tpu.matmul %41, %42, %cst_31 {dimension_numbers = #tpu.dot_dimension_numbers<[1], [0], [0], [1], [0, 0, 1, 1], [], []>} : vector<128x128xbf16>, vector<128x128xbf16>, vector<128x128xf32> -> vector<128x128xf32>
      %c0_32 = arith.constant 0 : index
      %c0_33 = arith.constant 0 : index
      %44 = vector.load %arg8[%c0_32, %c0_33] : memref<1x128xf32, #tpu.memory_space<vmem>>, vector<1x128xf32>
      %45 = vector.broadcast %44 : vector<1x128xf32> to vector<128x128xf32>
      %46 = arith.addf %43, %45 : vector<128x128xf32>
      %c0_34 = arith.constant 0 : index
      %c0_35 = arith.constant 0 : index
      %47 = vector.load %arg9[%c0_34, %c0_35] : memref<1x128xf32, #tpu.memory_space<vmem>>, vector<1x128xf32>
      %48 = vector.broadcast %47 : vector<1x128xf32> to vector<128x128xf32>
      %49 = arith.mulf %46, %48 : vector<128x128xf32>
      %c0_36 = arith.constant 0 : index
      %c0_37 = arith.constant 0 : index
      %50 = vector.load %arg10[%c0_36, %c0_37] : memref<1x128xf32, #tpu.memory_space<vmem>>, vector<1x128xf32>
      %51 = vector.broadcast %50 : vector<1x128xf32> to vector<128x128xf32>
      %52 = arith.addf %49, %51 : vector<128x128xf32>
      %c0_38 = arith.constant 0 : index
      %c0_39 = arith.constant 0 : index
      %c0_40 = arith.constant 0 : index
      %53 = vector.load %arg6[%c0_38, %c0_39, %c0_40] : memref<1x128x128xf32, #tpu.memory_space<vmem>>, vector<1x128x128xf32>
      %54 = vector.shape_cast %53 : vector<1x128x128xf32> to vector<128x128xf32>
      %55 = arith.addf %54, %52 : vector<128x128xf32>
      %c0_41 = arith.constant 0 : index
      %c0_42 = arith.constant 0 : index
      %c0_43 = arith.constant 0 : index
      %56 = vector.load %arg11[%c0_41, %c0_42, %c0_43] : memref<1x128x128xf32, #tpu.memory_space<vmem>>, vector<1x128x128xf32>
      %57 = vector.shape_cast %56 : vector<1x128x128xf32> to vector<128x128xf32>
      %58 = vector.shape_cast %55 : vector<128x128xf32> to vector<1x128x128xf32>
      tpu.vector_store %arg11[%c0_41, %c0_42, %c0_43], %58 {strides = array<i32>} : memref<1x128x128xf32, #tpu.memory_space<vmem>>, vector<1x128x128xf32>,
    } else {
    }
    return
  }
  func.func @transform_0(%arg0: i32, %arg1: i32, %arg2: i32) -> (i32, i32, i32) {
    %c0_i32 = arith.constant 0 : i32
    %c0_i32_0 = arith.constant 0 : i32
    return %arg0, %arg1, %c0_i32 : i32, i32, i32
  }
  func.func @transform_1(%arg0: i32, %arg1: i32, %arg2: i32) -> (i32, i32, i32) {
    %c0_i32 = arith.constant 0 : i32
    %c0_i32_0 = arith.constant 0 : i32
    return %arg0, %arg2, %c0_i32 : i32, i32, i32
  }
  func.func @transform_2(%arg0: i32, %arg1: i32, %arg2: i32) -> (i32, i32, i32) {
    %c0_i32 = arith.constant 0 : i32
    %c0_i32_0 = arith.constant 0 : i32
    return %arg0, %arg2, %c0_i32 : i32, i32, i32
  }
  func.func @transform_3(%arg0: i32, %arg1: i32, %arg2: i32) -> (i32, i32, i32) {
    %c0_i32 = arith.constant 0 : i32
    %c0_i32_0 = arith.constant 0 : i32
    return %arg0, %arg1, %c0_i32 : i32, i32, i32
  }
  func.func @transform_4(%arg0: i32, %arg1: i32, %arg2: i32) -> (i32, i32) {
    %c0_i32 = arith.constant 0 : i32
    %c0_i32_0 = arith.constant 0 : i32
    %c0_i32_1 = arith.constant 0 : i32
    return %c0_i32, %c0_i32_0 : i32, i32
  }
  func.func @transform_5(%arg0: i32, %arg1: i32, %arg2: i32) -> (i32, i32) {
    %c0_i32 = arith.constant 0 : i32
    %c0_i32_0 = arith.constant 0 : i32
    %c0_i32_1 = arith.constant 0 : i32
    return %c0_i32, %c0_i32_0 : i32, i32
  }
  func.func @transform_6(%arg0: i32, %arg1: i32, %arg2: i32) -> (i32, i32) {
    %c0_i32 = arith.constant 0 : i32
    %c0_i32_0 = arith.constant 0 : i32
    %c0_i32_1 = arith.constant 0 : i32
    return %c0_i32, %c0_i32_0 : i32, i32
  }
  func.func @transform_7(%arg0: i32, %arg1: i32, %arg2: i32) -> (i32, i32) {
    %c0_i32 = arith.constant 0 : i32
    %c0_i32_0 = arith.constant 0 : i32
    %c0_i32_1 = arith.constant 0 : i32
    return %c0_i32, %c0_i32_0 : i32, i32
  }
  func.func @transform_8(%arg0: i32, %arg1: i32, %arg2: i32) -> (i32, i32, i32) {
    %c0_i32 = arith.constant 0 : i32
    %c0_i32_0 = arith.constant 0 : i32
    return %arg0, %arg1, %c0_i32 : i32, i32, i32
  }
}

</mosaic_0001>

<llo_original>
// kernel: tpu_custom_call.1
$region0: #{tpu_custom_call.1}
  #allocation0 [shape = 'u32[]', space=smem, size = 0x4, offset = 0x4, fixed_abs, tag = 'smem constant byte address 0x4 - core index']
  #allocation1 [shape = 'u32[144,128]{1,0:T(1,128)}', space=vmem, size = 0x12000, scoped, tag = 'internal scratch']
  #allocation2 [shape = 'f32[128,1]{1,0:T(8,128)}', space=vmem, size = 0x10000, scoped, tag = 'scratch operand']
  #allocation3 [shape = 'f32[128,1]{1,0:T(8,128)}', space=vmem, size = 0x10000, scoped, tag = 'scratch operand']
  #allocation4 [shape = 'f32[128,128]{1,0:T(8,128)}', space=vmem, size = 0x10000, scoped, tag = 'scratch operand']
  %s0 = inlined_call_operand.hbm [shape: bf16[2,256,128], index: 0, kind: input, shape index: {}]
  %s1 = inlined_call_operand.hbm [shape: bf16[2,256,128], index: 1, kind: input, shape index: {}]
  %s2 = inlined_call_operand.hbm [shape: bf16[2,256,128], index: 2, kind: input, shape index: {}]
  %s3 = inlined_call_operand.hbm [shape: f32[2,256,128], index: 3, kind: input, shape index: {}]
  %s4 = inlined_call_operand.hbm [shape: bf16[128,128], index: 4, kind: input, shape index: {}]
  %s5 = inlined_call_operand.vmem [shape: f32[1,128], index: 5, kind: input, shape index: {}]
  %s6 = inlined_call_operand.vmem [shape: f32[1,128], index: 6, kind: input, shape index: {}]
  %s7 = inlined_call_operand.vmem [shape: f32[1,128], index: 7, kind: input, shape index: {}]
  %s8 = inlined_call_operand.hbm [shape: f32[2,256,128], index: 8, kind: output, shape index: {}]
  %s9 = sld [smem:[#allocation0]]
  $region93: #{tpu_custom_call.1} parent=0
    _
  %s11 = ssub.s32 1, %s9
  %s12 = scalar_select 0, %s11, %s9
  $region1: #{tpu_custom_call.1} parent=0
    #allocation5 [shape = 'u8[65536]{0}', space=vmem, size = 0x10000, scoped, tag = 'input window, operand 0']
    #allocation6 [shape = 's32[2]{0}', space=sflag, size = 0x8, scoped, tag = 'scoped memory for tpu_custom_call.1']
    #allocation7 [shape = 's32[2]{0}', space=sflag, size = 0x8, scoped, tag = 'scoped memory for tpu_custom_call.1']
    #allocation8 [shape = 'u8[65536]{0}', space=vmem, size = 0x10000, scoped, tag = 'input window, operand 1']
    #allocation9 [shape = 's32[2]{0}', space=sflag, size = 0x8, scoped, tag = 'scoped memory for tpu_custom_call.1']
    #allocation10 [shape = 'u8[65536]{0}', space=vmem, size = 0x10000, scoped, tag = 'input window, operand 2']
    #allocation11 [shape = 'u8[131072]{0}', space=vmem, size = 0x20000, scoped, tag = 'input window, operand 3']
    #allocation12 [shape = 's32[2]{0}', space=sflag, size = 0x8, scoped, tag = 'scoped memory for tpu_custom_call.1']
    #allocation13 [shape = 'u8[32768]{0}', space=vmem, size = 0x8000, scoped, tag = 'input window, operand 4, single buffered']
    #allocation14 [shape = 'u8[131072]{0}', space=vmem, size = 0x20000, scoped, tag = 'output window, operand 0']
    %13 = vsyncpa [#allocation6], 0
    %s14 = scalar_lea.sflag [#allocation6], 1
    %15 = vsyncpa %s14, 0
    %16 = vsyncpa [#allocation9], 0
    %s17 = scalar_lea.sflag [#allocation9], 1
    %18 = vsyncpa %s17, 0
    %19 = vsyncpa [#allocation12], 0
    %s20 = scalar_lea.sflag [#allocation12], 1
    %21 = vsyncpa %s20, 0
    %22 = vsyncpa [#allocation7], 0
    %s23 = scalar_lea.sflag [#allocation7], 1
    %24 = vsyncpa %s23, 0
    loop: start=0, step=1, limit=10
    $region2: #{tpu_custom_call.1} parent=1 // loop_pre_header
      _
    $region3: #{tpu_custom_call.1} parent=1 // loop_header
      %s26 = sphi 0, %s30
      %p27 = scmp.ge.s32.totalorder %s26, 10
      %s33 = sphi 0, %s52
      %s34 = sphi 0, %s48
      %s35 = sphi 0, %s44
      %s36 = sphi 0, %s33
      %s37 = sphi 0, %s34
      %s38 = sphi 0, %s35
      %s39 = sphi 0, %s36
      %s40 = sphi 0, %s37
      %s41 = sphi 0, %s38
      %s57 = sphi 0, %s59
      %s60 = sphi 0, %s57
      %s61 = sphi 0, %s60
      %s77 = sphi 0, %s61
      %s85 = sphi 0, %s87
      %s88 = sphi 0, %s85
      %s89 = sphi 0, %s88
      %s105 = sphi 0, %s89
      %s113 = sphi 0, %s115
      %s116 = sphi 0, %s113
      %s117 = sphi 0, %s116
      %s133 = sphi 0, %s117
      %s141 = sphi 0, %s143
      %s144 = sphi 0, %s141
      %s145 = sphi 0, %s144
      %s161 = sphi 0, %s145
      %s165 = sphi 0, %s165
      %s167 = sphi 0, %s165
      %s168 = sphi 0, %s167
      %s182 = sphi 0, %s168
      %s186 = sphi 0, %s186
      %s188 = sphi 0, %s186
      %s189 = sphi 0, %s188
      %s203 = sphi 0, %s189
      %s207 = sphi 0, %s207
      %s209 = sphi 0, %s207
      %s210 = sphi 0, %s209
      %s224 = sphi 0, %s210
      %s228 = sphi 0, %s228
      %s230 = sphi 0, %s228
      %s231 = sphi 0, %s230
      %s245 = sphi 0, %s231
      %s253 = sphi 0, %s255
      %s256 = sphi 0, %s253
      %s257 = sphi 0, %s256
      %s273 = sphi 0, %s257
    $region4: #{tpu_custom_call.1} parent=1 // loop_header_branch
      %29 = sbr.rel (%p27) target = $region8
    $region5: #{tpu_custom_call.1} parent=1 // loop_body
      %s31 = ssub.s32 %s26, 1
      %s32 = ssub.s32 %s26, 2
      %s42 = sadd.s32 1, %s35
      %p43 = scmp.ge.s32.totalorder %s42, 2
      %s44 = scalar_select %p43, 0, %s42
      %s45 = sadd.s32 1, %s34
      %s46 = scalar_select %p43, %s45, %s34
      %p47 = scmp.ge.s32.totalorder %s46, 2
      %s48 = scalar_select %p47, 0, %s46
      %s49 = sadd.s32 1, %s33
      %s50 = scalar_select %p47, %s49, %s33
      %p51 = scmp.ge.s32.totalorder %s50, 2
      %s52 = scalar_select %p51, 0, %s50
      %s53 = ssub.s32 %s33, %s52
      %s54 = ssub.s32 %s34, %s48
      %s55 = sor.u32 %s53, %s54
      %p56 = scmp.eq.s32.totalorder %s55, 0
      %s58 = sadd.s32 %s57, 1
      %s59 = scalar_select %p56, %s57, %s58
      %p62 = pneg %p56
      %p63 = scmp.eq.s32.totalorder %s26, 7
      %p64 = por %p62, %p63
      %p65 = scmp.ne.s32.totalorder %s57, %s60
      %p66 = scmp.eq.s32.totalorder %s26, 0
      %p67 = por %p65, %p66
      %p68 = scmp.ne.s32.totalorder %s57, %s60
      %p69 = scmp.eq.s32.totalorder %s31, 7
      %p70 = por %p68, %p69
      %p71 = scmp.ne.s32.totalorder %s60, %s61
      %p72 = scmp.eq.s32.totalorder %s31, 0
      %p73 = por %p71, %p72
      %p74 = scmp.ne.s32.totalorder %s60, %s61
      %p75 = scmp.eq.s32.totalorder %s32, 7
      %p76 = por %p74, %p75
      %p78 = scmp.ne.s32.totalorder %s61, %s77
      %p79 = scmp.eq.s32.totalorder %s32, 0
      %p80 = por %p78, %p79
      %s81 = ssub.s32 %s33, %s52
      %s82 = ssub.s32 %s35, %s44
      %s83 = sor.u32 %s81, %s82
      %p84 = scmp.eq.s32.totalorder %s83, 0
      %s86 = sadd.s32 %s85, 1
      %s87 = scalar_select %p84, %s85, %s86
      %p90 = pneg %p84
      %p91 = scmp.eq.s32.totalorder %s26, 7
      %p92 = por %p90, %p91
      %p93 = scmp.ne.s32.totalorder %s85, %s88
      %p94 = scmp.eq.s32.totalorder %s26, 0
      %p95 = por %p93, %p94
      %p96 = scmp.ne.s32.totalorder %s85, %s88
      %p97 = scmp.eq.s32.totalorder %s31, 7
      %p98 = por %p96, %p97
      %p99 = scmp.ne.s32.totalorder %s88, %s89
      %p100 = scmp.eq.s32.totalorder %s31, 0
      %p101 = por %p99, %p100
      %p102 = scmp.ne.s32.totalorder %s88, %s89
      %p103 = scmp.eq.s32.totalorder %s32, 7
      %p104 = por %p102, %p103
      %p106 = scmp.ne.s32.totalorder %s89, %s105
      %p107 = scmp.eq.s32.totalorder %s32, 0
      %p108 = por %p106, %p107
      %s109 = ssub.s32 %s33, %s52
      %s110 = ssub.s32 %s35, %s44
      %s111 = sor.u32 %s109, %s110
      %p112 = scmp.eq.s32.totalorder %s111, 0
      %s114 = sadd.s32 %s113, 1
      %s115 = scalar_select %p112, %s113, %s114
      %p118 = pneg %p112
      %p119 = scmp.eq.s32.totalorder %s26, 7
      %p120 = por %p118, %p119
      %p121 = scmp.ne.s32.totalorder %s113, %s116
      %p122 = scmp.eq.s32.totalorder %s26, 0
      %p123 = por %p121, %p122
      %p124 = scmp.ne.s32.totalorder %s113, %s116
      %p125 = scmp.eq.s32.totalorder %s31, 7
      %p126 = por %p124, %p125
      %p127 = scmp.ne.s32.totalorder %s116, %s117
      %p128 = scmp.eq.s32.totalorder %s31, 0
      %p129 = por %p127, %p128
      %p130 = scmp.ne.s32.totalorder %s116, %s117
      %p131 = scmp.eq.s32.totalorder %s32, 7
      %p132 = por %p130, %p131
      %p134 = scmp.ne.s32.totalorder %s117, %s133
      %p135 = scmp.eq.s32.totalorder %s32, 0
      %p136 = por %p134, %p135
      %s137 = ssub.s32 %s33, %s52
      %s138 = ssub.s32 %s34, %s48
      %s139 = sor.u32 %s137, %s138
      %p140 = scmp.eq.s32.totalorder %s139, 0
      %s142 = sadd.s32 %s141, 1
      %s143 = scalar_select %p140, %s141, %s142
      %p146 = pneg %p140
      %p147 = scmp.eq.s32.totalorder %s26, 7
      %p148 = por %p146, %p147
      %p149 = scmp.ne.s32.totalorder %s141, %s144
      %p150 = scmp.eq.s32.totalorder %s26, 0
      %p151 = por %p149, %p150
      %p152 = scmp.ne.s32.totalorder %s141, %s144
      %p153 = scmp.eq.s32.totalorder %s31, 7
      %p154 = por %p152, %p153
      %p155 = scmp.ne.s32.totalorder %s144, %s145
      %p156 = scmp.eq.s32.totalorder %s31, 0
      %p157 = por %p155, %p156
      %p158 = scmp.ne.s32.totalorder %s144, %s145
      %p159 = scmp.eq.s32.totalorder %s32, 7
      %p160 = por %p158, %p159
      %p162 = scmp.ne.s32.totalorder %s145, %s161
      %p163 = scmp.eq.s32.totalorder %s32, 0
      %p164 = por %p162, %p163
      %s166 = sadd.s32 %s165, 1
      %p169 = scmp.eq.s32.totalorder %s26, 7
      %p170 = scmp.ne.s32.totalorder %s165, %s167
      %p171 = scmp.eq.s32.totalorder %s26, 0
      %p172 = por %p170, %p171
      %p173 = scmp.ne.s32.totalorder %s165, %s167
      %p174 = scmp.eq.s32.totalorder %s31, 7
      %p175 = por %p173, %p174
      %p176 = scmp.ne.s32.totalorder %s167, %s168
      %p177 = scmp.eq.s32.totalorder %s31, 0
      %p178 = por %p176, %p177
      %p179 = scmp.ne.s32.totalorder %s167, %s168
      %p180 = scmp.eq.s32.totalorder %s32, 7
      %p181 = por %p179, %p180
      %p183 = scmp.ne.s32.totalorder %s168, %s182
      %p184 = scmp.eq.s32.totalorder %s32, 0
      %p185 = por %p183, %p184
      %s187 = sadd.s32 %s186, 1
      %p190 = scmp.eq.s32.totalorder %s26, 7
      %p191 = scmp.ne.s32.totalorder %s186, %s188
      %p192 = scmp.eq.s32.totalorder %s26, 0
      %p193 = por %p191, %p192
      %p194 = scmp.ne.s32.totalorder %s186, %s188
      %p195 = scmp.eq.s32.totalorder %s31, 7
      %p196 = por %p194, %p195
      %p197 = scmp.ne.s32.totalorder %s188, %s189
      %p198 = scmp.eq.s32.totalorder %s31, 0
      %p199 = por %p197, %p198
      %p200 = scmp.ne.s32.totalorder %s188, %s189
      %p201 = scmp.eq.s32.totalorder %s32, 7
      %p202 = por %p200, %p201
      %p204 = scmp.ne.s32.totalorder %s189, %s203
      %p205 = scmp.eq.s32.totalorder %s32, 0
      %p206 = por %p204, %p205
      %s208 = sadd.s32 %s207, 1
      %p211 = scmp.eq.s32.totalorder %s26, 7
      %p212 = scmp.ne.s32.totalorder %s207, %s209
      %p213 = scmp.eq.s32.totalorder %s26, 0
      %p214 = por %p212, %p213
      %p215 = scmp.ne.s32.totalorder %s207, %s209
      %p216 = scmp.eq.s32.totalorder %s31, 7
      %p217 = por %p215, %p216
      %p218 = scmp.ne.s32.totalorder %s209, %s210
      %p219 = scmp.eq.s32.totalorder %s31, 0
      %p220 = por %p218, %p219
      %p221 = scmp.ne.s32.totalorder %s209, %s210
      %p222 = scmp.eq.s32.totalorder %s32, 7
      %p223 = por %p221, %p222
      %p225 = scmp.ne.s32.totalorder %s210, %s224
      %p226 = scmp.eq.s32.totalorder %s32, 0
      %p227 = por %p225, %p226
      %s229 = sadd.s32 %s228, 1
      %p232 = scmp.eq.s32.totalorder %s26, 7
      %p233 = scmp.ne.s32.totalorder %s228, %s230
      %p234 = scmp.eq.s32.totalorder %s26, 0
      %p235 = por %p233, %p234
      %p236 = scmp.ne.s32.totalorder %s228, %s230
      %p237 = scmp.eq.s32.totalorder %s31, 7
      %p238 = por %p236, %p237
      %p239 = scmp.ne.s32.totalorder %s230, %s231
      %p240 = scmp.eq.s32.totalorder %s31, 0
      %p241 = por %p239, %p240
      %p242 = scmp.ne.s32.totalorder %s230, %s231
      %p243 = scmp.eq.s32.totalorder %s32, 7
      %p244 = por %p242, %p243
      %p246 = scmp.ne.s32.totalorder %s231, %s245
      %p247 = scmp.eq.s32.totalorder %s32, 0
      %p248 = por %p246, %p247
      %s249 = ssub.s32 %s33, %s52
      %s250 = ssub.s32 %s34, %s48
      %s251 = sor.u32 %s249, %s250
      %p252 = scmp.eq.s32.totalorder %s251, 0
      %s254 = sadd.s32 %s253, 1
      %s255 = scalar_select %p252, %s253, %s254
      %p258 = pneg %p252
      %p259 = scmp.eq.s32.totalorder %s26, 7
      %p260 = por %p258, %p259
      %p261 = scmp.ne.s32.totalorder %s253, %s256
      %p262 = scmp.eq.s32.totalorder %s26, 0
      %p263 = por %p261, %p262
      %p264 = scmp.ne.s32.totalorder %s253, %s256
      %p265 = scmp.eq.s32.totalorder %s31, 7
      %p266 = por %p264, %p265
      %p267 = scmp.ne.s32.totalorder %s256, %s257
      %p268 = scmp.eq.s32.totalorder %s31, 0
      %p269 = por %p267, %p268
      %p270 = scmp.ne.s32.totalorder %s256, %s257
      %p271 = scmp.eq.s32.totalorder %s32, 7
      %p272 = por %p270, %p271
      %p274 = scmp.ne.s32.totalorder %s257, %s273
      %p275 = scmp.eq.s32.totalorder %s32, 0
      %p276 = por %p274, %p275
      %p277 = scmp.le.s32.totalorder 1, %s26
      %p278 = scmp.lt.s32.totalorder %s26, 9
      %p279 = pnand %p277, %p278
      %p280 = pneg %p279
      // Predicated region
      $region9: #{tpu_custom_call.1} parent=5 // pred_check
        _
      $region10: #{tpu_custom_call.1} parent=5 // pred_check_branch
        %282 = sbr.rel (%p279) target = $region12
      $region11: #{tpu_custom_call.1} parent=5 // pred_region
        %s283 = ssub.s32 %s26, 1
        // Predicated region
        $region13: #{tpu_custom_call.1} parent=11 // pred_check
          %p284 = pneg %p178
        $region14: #{tpu_custom_call.1} parent=11 // pred_check_branch
          %286 = sbr.rel (%p284) target = $region16
        $region15: #{tpu_custom_call.1} parent=11 // pred_region
          %s288 = ssub.s32 1024, 1024
          %289 = vsyncadd [#allocation12], %s288
          %s290 = sshll.u32 [#allocation13], 4
          %s291 = int_to_ptr.vmem [resolvable:$true] %s290
          %296 = dma.hbm_to_vmem [thread:$0]  %s4, 1024, %s291, [#allocation12], 64, 64, 4
        $region16: #{tpu_custom_call.1} parent=11 // pred_fallthru
          _
        // Predicated region
        $region17: #{tpu_custom_call.1} parent=11 // pred_check
          %p297 = pneg %p199
        $region18: #{tpu_custom_call.1} parent=11 // pred_check_branch
          %299 = sbr.rel (%p297) target = $region20
        $region19: #{tpu_custom_call.1} parent=11 // pred_region
          _
        $region20: #{tpu_custom_call.1} parent=11 // pred_fallthru
          _
        // Predicated region
        $region21: #{tpu_custom_call.1} parent=11 // pred_check
          %p300 = pneg %p220
        $region22: #{tpu_custom_call.1} parent=11 // pred_check_branch
          %302 = sbr.rel (%p300) target = $region24
        $region23: #{tpu_custom_call.1} parent=11 // pred_region
          _
        $region24: #{tpu_custom_call.1} parent=11 // pred_fallthru
          _
        // Predicated region
        $region25: #{tpu_custom_call.1} parent=11 // pred_check
          %p303 = pneg %p241
        $region26: #{tpu_custom_call.1} parent=11 // pred_check_branch
          %305 = sbr.rel (%p303) target = $region28
        $region27: #{tpu_custom_call.1} parent=11 // pred_region
          _
        $region28: #{tpu_custom_call.1} parent=11 // pred_fallthru
          _
      $region12: #{tpu_custom_call.1} parent=5 // pred_fallthru
        _
      %p306 = scmp.lt.s32.totalorder %s26, 8
      // Predicated region
      $region29: #{tpu_custom_call.1} parent=5 // pred_check
        %p307 = pneg %p306
      $region30: #{tpu_custom_call.1} parent=5 // pred_check_branch
        %309 = sbr.rel (%p307) target = $region32
      $region31: #{tpu_custom_call.1} parent=5 // pred_region
        // Predicated region
        $region33: #{tpu_custom_call.1} parent=31 // pred_check
          %p310 = pneg %p67
        $region34: #{tpu_custom_call.1} parent=31 // pred_check_branch
          %312 = sbr.rel (%p310) target = $region36
        $region35: #{tpu_custom_call.1} parent=31 // pred_region
          %s313 = sand.u32 %s57, 1
          %s314 = scalar_lea.sflag [#allocation6], %s313
          %s315 = sand.u32 %s57, 1
          %s316 = smul.addr %s315, 64
          %s317 = scalar_lea.vmem [#allocation5], %s316
          %s318 = smul.u32 16, %s34
          %s320 = ssub.s32 1024, 1024
          %321 = vsyncadd %s314, %s320
          %s322 = smul.addr %s33, 32
          %s323 = sadd.s32 %s318, %s322
          %s324 = smul.addr %s323, 64
          %s325 = scalar_lea.hbm %s0, %s324
          %s326 = sshll.u32 %s317, 4
          %s327 = int_to_ptr.vmem [resolvable:$true] %s326
          %332 = dma.hbm_to_vmem [thread:$0]  %s325, 1024, %s327, %s314, 64, 64, 4
        $region36: #{tpu_custom_call.1} parent=31 // pred_fallthru
          _
        // Predicated region
        $region37: #{tpu_custom_call.1} parent=31 // pred_check
          %p333 = pneg %p95
        $region38: #{tpu_custom_call.1} parent=31 // pred_check_branch
          %335 = sbr.rel (%p333) target = $region40
        $region39: #{tpu_custom_call.1} parent=31 // pred_region
          %s336 = sand.u32 %s26, 1
          %s337 = scalar_lea.sflag [#allocation9], %s336
          %s338 = sand.u32 %s85, 1
          %s339 = smul.addr %s338, 64
          %s340 = scalar_lea.vmem [#allocation8], %s339
          %s341 = smul.u32 16, %s35
          %s343 = ssub.s32 1024, 1024
          %344 = vsyncadd %s337, %s343
          %s345 = smul.addr %s33, 32
          %s346 = sadd.s32 %s341, %s345
          %s347 = smul.addr %s346, 64
          %s348 = scalar_lea.hbm %s1, %s347
          %s349 = sshll.u32 %s340, 4
          %s350 = int_to_ptr.vmem [resolvable:$true] %s349
          %355 = dma.hbm_to_vmem [thread:$0]  %s348, 1024, %s350, %s337, 64, 64, 4
        $region40: #{tpu_custom_call.1} parent=31 // pred_fallthru
          _
        // Predicated region
        $region41: #{tpu_custom_call.1} parent=31 // pred_check
          %p356 = pneg %p123
        $region42: #{tpu_custom_call.1} parent=31 // pred_check_branch
          %358 = sbr.rel (%p356) target = $region44
        $region43: #{tpu_custom_call.1} parent=31 // pred_region
          %s359 = sand.u32 %s26, 1
          %s360 = scalar_lea.sflag [#allocation9], %s359
          %s361 = sand.u32 %s113, 1
          %s362 = smul.addr %s361, 64
          %s363 = scalar_lea.vmem [#allocation10], %s362
          %s364 = smul.u32 16, %s35
          %s366 = ssub.s32 1024, 1024
          %367 = vsyncadd %s360, %s366
          %s368 = smul.addr %s33, 32
          %s369 = sadd.s32 %s364, %s368
          %s370 = smul.addr %s369, 64
          %s371 = scalar_lea.hbm %s2, %s370
          %s372 = sshll.u32 %s363, 4
          %s373 = int_to_ptr.vmem [resolvable:$true] %s372
          %378 = dma.hbm_to_vmem [thread:$0]  %s371, 1024, %s373, %s360, 64, 64, 4
        $region44: #{tpu_custom_call.1} parent=31 // pred_fallthru
          _
        // Predicated region
        $region45: #{tpu_custom_call.1} parent=31 // pred_check
          %p379 = pneg %p151
        $region46: #{tpu_custom_call.1} parent=31 // pred_check_branch
          %381 = sbr.rel (%p379) target = $region48
        $region47: #{tpu_custom_call.1} parent=31 // pred_region
          %s382 = sand.u32 %s26, 1
          %s383 = scalar_lea.sflag [#allocation12], %s382
          %s384 = sand.u32 %s141, 1
          %s385 = smul.addr %s384, 128
          %s386 = scalar_lea.vmem [#allocation11], %s385
          %s387 = smul.u32 16, %s34
          %s389 = ssub.s32 2048, 2048
          %390 = vsyncadd %s383, %s389
          %s391 = smul.addr %s33, 32
          %s392 = sadd.s32 %s387, %s391
          %s393 = smul.addr %s392, 128
          %s394 = scalar_lea.hbm %s3, %s393
          %s395 = sshll.u32 %s386, 4
          %s396 = int_to_ptr.vmem [resolvable:$true] %s395
          %401 = dma.hbm_to_vmem [thread:$0]  %s394, 2048, %s396, %s383, 128, 128, 8
        $region48: #{tpu_custom_call.1} parent=31 // pred_fallthru
          _
      $region32: #{tpu_custom_call.1} parent=5 // pred_fallthru
        _
      %p402 = scmp.le.s32.totalorder 1, %s26
      %p403 = scmp.lt.s32.totalorder %s26, 9
      %p404 = pnand %p402, %p403
      %p405 = pneg %p404
      // Predicated region
      $region49: #{tpu_custom_call.1} parent=5 // pred_check
        _
      $region50: #{tpu_custom_call.1} parent=5 // pred_check_branch
        %407 = sbr.rel (%p404) target = $region52
      $region51: #{tpu_custom_call.1} parent=5 // pred_region
        %s408 = ssub.s32 %s26, 1
        %s409 = sand.u32 %s60, 1
        %s410 = scalar_lea.sflag [#allocation6], %s409
        %s411 = sand.u32 %s60, 1
        %s412 = smul.addr %s411, 64
        %s413 = scalar_lea.vmem [#allocation5], %s412
        // Predicated region
        $region53: #{tpu_custom_call.1} parent=51 // pred_check
          %p414 = pneg %p73
        $region54: #{tpu_custom_call.1} parent=51 // pred_check_branch
          %416 = sbr.rel (%p414) target = $region56
        $region55: #{tpu_custom_call.1} parent=51 // pred_region
          %417 = dma.done %s410, 1024
        $region56: #{tpu_custom_call.1} parent=51 // pred_fallthru
          _
        %s418 = sand.u32 %s31, 1
        %s419 = scalar_lea.sflag [#allocation9], %s418
        %s420 = sand.u32 %s88, 1
        %s421 = smul.addr %s420, 64
        %s422 = scalar_lea.vmem [#allocation8], %s421
        // Predicated region
        $region57: #{tpu_custom_call.1} parent=51 // pred_check
          %p423 = pneg %p101
        $region58: #{tpu_custom_call.1} parent=51 // pred_check_branch
          %425 = sbr.rel (%p423) target = $region60
        $region59: #{tpu_custom_call.1} parent=51 // pred_region
          %426 = dma.done %s419, 1024
        $region60: #{tpu_custom_call.1} parent=51 // pred_fallthru
          _
        %s427 = sand.u32 %s31, 1
        %s428 = scalar_lea.sflag [#allocation9], %s427
        %s429 = sand.u32 %s116, 1
        %s430 = smul.addr %s429, 64
        %s431 = scalar_lea.vmem [#allocation10], %s430
        // Predicated region
        $region61: #{tpu_custom_call.1} parent=51 // pred_check
          %p432 = pneg %p129
        $region62: #{tpu_custom_call.1} parent=51 // pred_check_branch
          %434 = sbr.rel (%p432) target = $region64
        $region63: #{tpu_custom_call.1} parent=51 // pred_region
          %435 = dma.done %s428, 1024
        $region64: #{tpu_custom_call.1} parent=51 // pred_fallthru
          _
        %s436 = sand.u32 %s31, 1
        %s437 = scalar_lea.sflag [#allocation12], %s436
        %s438 = sand.u32 %s144, 1
        %s439 = smul.addr %s438, 128
        %s440 = scalar_lea.vmem [#allocation11], %s439
        // Predicated region
        $region65: #{tpu_custom_call.1} parent=51 // pred_check
          %p441 = pneg %p157
        $region66: #{tpu_custom_call.1} parent=51 // pred_check_branch
          %443 = sbr.rel (%p441) target = $region68
        $region67: #{tpu_custom_call.1} parent=51 // pred_region
          %444 = dma.done %s437, 2048
        $region68: #{tpu_custom_call.1} parent=51 // pred_fallthru
          _
        // Predicated region
        $region69: #{tpu_custom_call.1} parent=51 // pred_check
          %p445 = pneg %p178
        $region70: #{tpu_custom_call.1} parent=51 // pred_check_branch
          %447 = sbr.rel (%p445) target = $region72
        $region71: #{tpu_custom_call.1} parent=51 // pred_region
          %448 = dma.done [#allocation12], 1024
        $region72: #{tpu_custom_call.1} parent=51 // pred_fallthru
          _
        %s449 = sand.u32 %s60, 1
        %s450 = scalar_lea.sflag [#allocation6], %s449
        %s451 = sand.u32 %s60, 1
        %s452 = smul.addr %s451, 64
        %s453 = scalar_lea.vmem [#allocation5], %s452
        %p454 = pneg %p73
        %p455 = pneg %p70
        %s456 = sand.u32 %s31, 1
        %s457 = scalar_lea.sflag [#allocation9], %s456
        %s458 = sand.u32 %s88, 1
        %s459 = smul.addr %s458, 64
        %s460 = scalar_lea.vmem [#allocation8], %s459
        %p461 = pneg %p101
        %p462 = pneg %p98
        %s463 = sand.u32 %s31, 1
        %s464 = scalar_lea.sflag [#allocation9], %s463
        %s465 = sand.u32 %s116, 1
        %s466 = smul.addr %s465, 64
        %s467 = scalar_lea.vmem [#allocation10], %s466
        %p468 = pneg %p129
        %p469 = pneg %p126
        %s470 = sand.u32 %s31, 1
        %s471 = scalar_lea.sflag [#allocation12], %s470
        %s472 = sand.u32 %s144, 1
        %s473 = smul.addr %s472, 128
        %s474 = scalar_lea.vmem [#allocation11], %s473
        %p475 = pneg %p157
        %p476 = pneg %p154
        %p477 = pneg %p178
        %p478 = pneg %p175
        %p479 = pneg %p199
        %p480 = pneg %p196
        %p481 = pneg %p220
        %p482 = pneg %p217
        %p483 = pneg %p241
        %p484 = pneg %p238
        %p485 = pneg %p269
        %p486 = pneg %p266
        %s487 = sand.u32 %s256, 1
        %s488 = scalar_lea.sflag [#allocation7], %s487
        %s489 = sand.u32 %s256, 1
        %s490 = smul.addr %s489, 128
        %s491 = scalar_lea.vmem [#allocation14], %s490
        %s492 = smul.u32 16, %s37
        %s493 = smul.u32 16, %s38
        %s494 = smul.u32 16, %s38
        %s495 = smul.u32 16, %s37
        %s496 = smul.u32 16, %s37
        %p498 = scmp.eq.s32.totalorder %s38, 0
        // Predicated region
        $region73: #{tpu_custom_call.1} parent=51 // pred_check
          %p499 = pneg %p498
        $region74: #{tpu_custom_call.1} parent=51 // pred_check_branch
          %501 = sbr.rel (%p499) target = $region76
        $region75: #{tpu_custom_call.1} parent=51 // pred_region
          %vm502 = vcmask 7168
          %503 = vst.msk [vmem:[#allocation2] sm:$0xff] %vm502, -inf
          %504 = vst.msk [vmem:[#allocation2 + $0x8] sm:$0xff] %vm502, -inf
          %505 = vst.msk [vmem:[#allocation2 + $0x10] sm:$0xff] %vm502, -inf
          %506 = vst.msk [vmem:[#allocation2 + $0x18] sm:$0xff] %vm502, -inf
          %507 = vst.msk [vmem:[#allocation2 + $0x20] sm:$0xff] %vm502, -inf
          %508 = vst.msk [vmem:[#allocation2 + $0x28] sm:$0xff] %vm502, -inf
          %509 = vst.msk [vmem:[#allocation2 + $0x30] sm:$0xff] %vm502, -inf
          %510 = vst.msk [vmem:[#allocation2 + $0x38] sm:$0xff] %vm502, -inf
          %511 = vst.msk [vmem:[#allocation2 + $0x40] sm:$0xff] %vm502, -inf
          %512 = vst.msk [vmem:[#allocation2 + $0x48] sm:$0xff] %vm502, -inf
          %513 = vst.msk [vmem:[#allocation2 + $0x50] sm:$0xff] %vm502, -inf
          %514 = vst.msk [vmem:[#allocation2 + $0x58] sm:$0xff] %vm502, -inf
          %515 = vst.msk [vmem:[#allocation2 + $0x60] sm:$0xff] %vm502, -inf
          %516 = vst.msk [vmem:[#allocation2 + $0x68] sm:$0xff] %vm502, -inf
          %517 = vst.msk [vmem:[#allocation2 + $0x70] sm:$0xff] %vm502, -inf
          %518 = vst.msk [vmem:[#allocation2 + $0x78] sm:$0xff] %vm502, -inf
          %519 = vst.msk [vmem:[#allocation3] sm:$0xff] %vm502, 0.0
          %520 = vst.msk [vmem:[#allocation3 + $0x8] sm:$0xff] %vm502, 0.0
          %521 = vst.msk [vmem:[#allocation3 + $0x10] sm:$0xff] %vm502, 0.0
          %522 = vst.msk [vmem:[#allocation3 + $0x18] sm:$0xff] %vm502, 0.0
          %523 = vst.msk [vmem:[#allocation3 + $0x20] sm:$0xff] %vm502, 0.0
          %524 = vst.msk [vmem:[#allocation3 + $0x28] sm:$0xff] %vm502, 0.0
          %525 = vst.msk [vmem:[#allocation3 + $0x30] sm:$0xff] %vm502, 0.0
          %526 = vst.msk [vmem:[#allocation3 + $0x38] sm:$0xff] %vm502, 0.0
          %527 = vst.msk [vmem:[#allocation3 + $0x40] sm:$0xff] %vm502, 0.0
          %528 = vst.msk [vmem:[#allocation3 + $0x48] sm:$0xff] %vm502, 0.0
          %529 = vst.msk [vmem:[#allocation3 + $0x50] sm:$0xff] %vm502, 0.0
          %530 = vst.msk [vmem:[#allocation3 + $0x58] sm:$0xff] %vm502, 0.0
          %531 = vst.msk [vmem:[#allocation3 + $0x60] sm:$0xff] %vm502, 0.0
          %532 = vst.msk [vmem:[#allocation3 + $0x68] sm:$0xff] %vm502, 0.0
          %533 = vst.msk [vmem:[#allocation3 + $0x70] sm:$0xff] %vm502, 0.0
          %534 = vst.msk [vmem:[#allocation3 + $0x78] sm:$0xff] %vm502, 0.0
          %535 = vst [vmem:[#allocation4] sm:$0xff] 0.0
          %536 = vst [vmem:[#allocation4 + $0x8] sm:$0xff] 0.0
          %537 = vst [vmem:[#allocation4 + $0x10] sm:$0xff] 0.0
          %538 = vst [vmem:[#allocation4 + $0x18] sm:$0xff] 0.0
          %539 = vst [vmem:[#allocation4 + $0x20] sm:$0xff] 0.0
          %540 = vst [vmem:[#allocation4 + $0x28] sm:$0xff] 0.0
          %541 = vst [vmem:[#allocation4 + $0x30] sm:$0xff] 0.0
          %542 = vst [vmem:[#allocation4 + $0x38] sm:$0xff] 0.0
          %543 = vst [vmem:[#allocation4 + $0x40] sm:$0xff] 0.0
          %544 = vst [vmem:[#allocation4 + $0x48] sm:$0xff] 0.0
          %545 = vst [vmem:[#allocation4 + $0x50] sm:$0xff] 0.0
          %546 = vst [vmem:[#allocation4 + $0x58] sm:$0xff] 0.0
          %547 = vst [vmem:[#allocation4 + $0x60] sm:$0xff] 0.0
          %548 = vst [vmem:[#allocation4 + $0x68] sm:$0xff] 0.0
          %549 = vst [vmem:[#allocation4 + $0x70] sm:$0xff] 0.0
          %550 = vst [vmem:[#allocation4 + $0x78] sm:$0xff] 0.0
        $region76: #{tpu_custom_call.1} parent=51 // pred_fallthru
          _
        %v551 = vld [vmem:[%s413] sm:$0xf]
        %v552 = vld [vmem:[%s413 + $0x4] sm:$0xf]
        %v553 = vld [vmem:[%s413 + $0x8] sm:$0xf]
        %v554 = vld [vmem:[%s413 + $0xc] sm:$0xf]
        %v555 = vld [vmem:[%s413 + $0x10] sm:$0xf]
        %v556 = vld [vmem:[%s413 + $0x14] sm:$0xf]
        %v557 = vld [vmem:[%s413 + $0x18] sm:$0xf]
        %v558 = vld [vmem:[%s413 + $0x1c] sm:$0xf]
        %v559 = vld [vmem:[%s413 + $0x20] sm:$0xf]
        %v560 = vld [vmem:[%s413 + $0x24] sm:$0xf]
        %v561 = vld [vmem:[%s413 + $0x28] sm:$0xf]
        %v562 = vld [vmem:[%s413 + $0x2c] sm:$0xf]
        %v563 = vld [vmem:[%s413 + $0x30] sm:$0xf]
        %v564 = vld [vmem:[%s413 + $0x34] sm:$0xf]
        %v565 = vld [vmem:[%s413 + $0x38] sm:$0xf]
        %v566 = vld [vmem:[%s413 + $0x3c] sm:$0xf]
        %v567 = vld [vmem:[%s422] sm:$0xf]
        %v568 = vld [vmem:[%s422 + $0x4] sm:$0xf]
        %v569 = vld [vmem:[%s422 + $0x8] sm:$0xf]
        %v570 = vld [vmem:[%s422 + $0xc] sm:$0xf]
        %v571 = vld [vmem:[%s422 + $0x10] sm:$0xf]
        %v572 = vld [vmem:[%s422 + $0x14] sm:$0xf]
        %v573 = vld [vmem:[%s422 + $0x18] sm:$0xf]
        %v574 = vld [vmem:[%s422 + $0x1c] sm:$0xf]
        %v575 = vld [vmem:[%s422 + $0x20] sm:$0xf]
        %v576 = vld [vmem:[%s422 + $0x24] sm:$0xf]
        %v577 = vld [vmem:[%s422 + $0x28] sm:$0xf]
        %v578 = vld [vmem:[%s422 + $0x2c] sm:$0xf]
        %v579 = vld [vmem:[%s422 + $0x30] sm:$0xf]
        %v580 = vld [vmem:[%s422 + $0x34] sm:$0xf]
        %v581 = vld [vmem:[%s422 + $0x38] sm:$0xf]
        %v582 = vld [vmem:[%s422 + $0x3c] sm:$0xf]
        %v599 = vunpack.c.l.b16 %v551
        %v600 = vunpack.c.l.b16 %v552
        %v601 = vunpack.c.l.b16 %v553
        %v602 = vunpack.c.l.b16 %v554
        %v603 = vunpack.c.l.b16 %v555
        %v604 = vunpack.c.l.b16 %v556
        %v605 = vunpack.c.l.b16 %v557
        %v606 = vunpack.c.l.b16 %v558
        %v607 = vunpack.c.l.b16 %v559
        %v608 = vunpack.c.l.b16 %v560
        %v609 = vunpack.c.l.b16 %v561
        %v610 = vunpack.c.l.b16 %v562
        %v611 = vunpack.c.l.b16 %v563
        %v612 = vunpack.c.l.b16 %v564
        %v613 = vunpack.c.l.b16 %v565
        %v614 = vunpack.c.l.b16 %v566
        %v615 = vpack.c.b16 %v600, %v599
        %v616 = vpack.c.b16 %v602, %v601
        %v617 = vpack.c.b16 %v604, %v603
        %v618 = vpack.c.b16 %v606, %v605
        %v619 = vpack.c.b16 %v608, %v607
        %v620 = vpack.c.b16 %v610, %v609
        %v621 = vpack.c.b16 %v612, %v611
        %v622 = vpack.c.b16 %v614, %v613
        %v647 = vunpack.c.l.b16 %v567
        %v648 = vunpack.c.l.b16 %v568
        %v649 = vunpack.c.l.b16 %v569
        %v650 = vunpack.c.l.b16 %v570
        %v651 = vunpack.c.l.b16 %v571
        %v652 = vunpack.c.l.b16 %v572
        %v653 = vunpack.c.l.b16 %v573
        %v654 = vunpack.c.l.b16 %v574
        %v655 = vunpack.c.l.b16 %v575
        %v656 = vunpack.c.l.b16 %v576
        %v657 = vunpack.c.l.b16 %v577
        %v658 = vunpack.c.l.b16 %v578
        %v659 = vunpack.c.l.b16 %v579
        %v660 = vunpack.c.l.b16 %v580
        %v661 = vunpack.c.l.b16 %v581
        %v662 = vunpack.c.l.b16 %v582
        %v663 = vpack.c.b16 %v648, %v647
        %v664 = vpack.c.b16 %v650, %v649
        %v665 = vpack.c.b16 %v652, %v651
        %v666 = vpack.c.b16 %v654, %v653
        %v667 = vpack.c.b16 %v656, %v655
        %v668 = vpack.c.b16 %v658, %v657
        %v669 = vpack.c.b16 %v660, %v659
        %v670 = vpack.c.b16 %v662, %v661
        %679 = vmatprep.subr.bf16.mxu0 0
        %680 = vmatpush1.bf16.xpose.msra.mxu0 %v663
        %681 = vmatprep.subr.bf16.mxu0 0
        %682 = vmatpush1.bf16.xpose.msra.mxu0 %v664
        %683 = vmatprep.subr.bf16.mxu0 0
        %684 = vmatpush1.bf16.xpose.msra.mxu0 %v665
        %685 = vmatprep.subr.bf16.mxu0 0
        %686 = vmatpush1.bf16.xpose.msra.mxu0 %v666
        %687 = vmatprep.subr.bf16.mxu0 0
        %688 = vmatpush1.bf16.xpose.msra.mxu0 %v667
        %689 = vmatprep.subr.bf16.mxu0 0
        %690 = vmatpush1.bf16.xpose.msra.mxu0 %v668
        %691 = vmatprep.subr.bf16.mxu0 0
        %692 = vmatpush1.bf16.xpose.msra.mxu0 %v669
        %693 = vmatprep.subr.bf16.mxu0 0
        %694 = vmatpush1.bf16.xpose.msra.mxu0 %v670
        %695 = vmatprep.subr.bf16.mxu0 0
        %696 = vmatpush1.bf16.xpose.msra.mxu0 0
        %697 = vmatprep.subr.bf16.mxu0 0
        %698 = vmatpush1.bf16.xpose.msra.mxu0 0
        %699 = vmatprep.subr.bf16.mxu0 0
        %700 = vmatpush1.bf16.xpose.msra.mxu0 0
        %701 = vmatprep.subr.bf16.mxu0 0
        %702 = vmatpush1.bf16.xpose.msra.mxu0 0
        %703 = vmatprep.subr.bf16.mxu0 0
        %704 = vmatpush1.bf16.xpose.msra.mxu0 0
        %705 = vmatprep.subr.bf16.mxu0 0
        %706 = vmatpush1.bf16.xpose.msra.mxu0 0
        %707 = vmatprep.subr.bf16.mxu0 0
        %708 = vmatpush1.bf16.xpose.msra.mxu0 0
        %709 = vmatprep.subr.bf16.mxu0 0
        %710 = vmatpush1.bf16.xpose.msra.mxu0 0
        %711 = vmatprep.mubr.bf16.mxu0 0
        %712 = vmatmul.mubr.bf16.gmra.mrb[0].mxu0 %v615
        %v713 = vpop.f32.mrb[0].mxu0
        %v714 = vadd.f32 0.0, %v713
        %v715 = vpop.f32.mrb[0].mxu0
        %v716 = vpop.f32.mrb[0].mxu0
        %v717 = vadd.f32 0.0, %v716
        %v718 = vpop.f32.mrb[0].mxu0
        %719 = vmatprep.mubr.bf16.mxu0 0
        %720 = vmatmul.mubr.bf16.gmra.mrb[0].mxu0 %v616
        %v721 = vpop.f32.mrb[0].mxu0
        %v722 = vadd.f32 0.0, %v721
        %v723 = vpop.f32.mrb[0].mxu0
        %v724 = vpop.f32.mrb[0].mxu0
        %v725 = vadd.f32 0.0, %v724
        %v726 = vpop.f32.mrb[0].mxu0
        %727 = vmatprep.mubr.bf16.mxu0 0
        %728 = vmatmul.mubr.bf16.gmra.mrb[0].mxu0 %v617
        %v729 = vpop.f32.mrb[0].mxu0
        %v730 = vadd.f32 0.0, %v729
        %v731 = vpop.f32.mrb[0].mxu0
        %v732 = vpop.f32.mrb[0].mxu0
        %v733 = vadd.f32 0.0, %v732
        %v734 = vpop.f32.mrb[0].mxu0
        %735 = vmatprep.mubr.bf16.mxu0 0
        %736 = vmatmul.mubr.bf16.gmra.mrb[0].mxu0 %v618
        %v737 = vpop.f32.mrb[0].mxu0
        %v738 = vadd.f32 0.0, %v737
        %v739 = vpop.f32.mrb[0].mxu0
        %v740 = vpop.f32.mrb[0].mxu0
        %v741 = vadd.f32 0.0, %v740
        %v742 = vpop.f32.mrb[0].mxu0
        %743 = vmatprep.mubr.bf16.mxu0 0
        %744 = vmatmul.mubr.bf16.gmra.mrb[0].mxu0 %v619
        %v745 = vpop.f32.mrb[0].mxu0
        %v746 = vadd.f32 0.0, %v745
        %v747 = vpop.f32.mrb[0].mxu0
        %v748 = vpop.f32.mrb[0].mxu0
        %v749 = vadd.f32 0.0, %v748
        %v750 = vpop.f32.mrb[0].mxu0
        %751 = vmatprep.mubr.bf16.mxu0 0
        %752 = vmatmul.mubr.bf16.gmra.mrb[0].mxu0 %v620
        %v753 = vpop.f32.mrb[0].mxu0
        %v754 = vadd.f32 0.0, %v753
        %v755 = vpop.f32.mrb[0].mxu0
        %v756 = vpop.f32.mrb[0].mxu0
        %v757 = vadd.f32 0.0, %v756
        %v758 = vpop.f32.mrb[0].mxu0
        %759 = vmatprep.mubr.bf16.mxu0 0
        %760 = vmatmul.mubr.bf16.gmra.mrb[0].mxu0 %v621
        %v761 = vpop.f32.mrb[0].mxu0
        %v762 = vadd.f32 0.0, %v761
        %v763 = vpop.f32.mrb[0].mxu0
        %v764 = vpop.f32.mrb[0].mxu0
        %v765 = vadd.f32 0.0, %v764
        %v766 = vpop.f32.mrb[0].mxu0
        %767 = vmatprep.mubr.bf16.mxu0 0
        %768 = vmatmul.mubr.bf16.gmra.mrb[0].mxu0 %v622
        %v769 = vpop.f32.mrb[0].mxu0
        %v770 = vadd.f32 0.0, %v769
        %v771 = vpop.f32.mrb[0].mxu0
        %v772 = vpop.f32.mrb[0].mxu0
        %v773 = vadd.f32 0.0, %v772
        %v774 = vpop.f32.mrb[0].mxu0
        %775 = vdwg.mxu0
        %v776 = vld [vmem:[#allocation2] sm:$0xff]
        %v777 = vld [vmem:[#allocation2 + $0x8] sm:$0xff]
        %v778 = vld [vmem:[#allocation2 + $0x10] sm:$0xff]
        %v779 = vld [vmem:[#allocation2 + $0x18] sm:$0xff]
        %v780 = vld [vmem:[#allocation2 + $0x20] sm:$0xff]
        %v781 = vld [vmem:[#allocation2 + $0x28] sm:$0xff]
        %v782 = vld [vmem:[#allocation2 + $0x30] sm:$0xff]
        %v783 = vld [vmem:[#allocation2 + $0x38] sm:$0xff]
        %v784 = vld [vmem:[#allocation2 + $0x40] sm:$0xff]
        %v785 = vld [vmem:[#allocation2 + $0x48] sm:$0xff]
        %v786 = vld [vmem:[#allocation2 + $0x50] sm:$0xff]
        %v787 = vld [vmem:[#allocation2 + $0x58] sm:$0xff]
        %v788 = vld [vmem:[#allocation2 + $0x60] sm:$0xff]
        %v789 = vld [vmem:[#allocation2 + $0x68] sm:$0xff]
        %v790 = vld [vmem:[#allocation2 + $0x70] sm:$0xff]
        %v791 = vld [vmem:[#allocation2 + $0x78] sm:$0xff]
        %792 = vmax.xlane.f32.xlu0 %v714
        %v793 = vpop.xlane.xlu0 %792
        %794 = vmax.xlane.f32.xlu0 %v717
        %v795 = vpop.xlane.xlu0 %794
        %796 = vmax.xlane.f32.xlu0 %v722
        %v797 = vpop.xlane.xlu0 %796
        %798 = vmax.xlane.f32.xlu0 %v725
        %v799 = vpop.xlane.xlu0 %798
        %800 = vmax.xlane.f32.xlu0 %v730
        %v801 = vpop.xlane.xlu0 %800
        %802 = vmax.xlane.f32.xlu0 %v733
        %v803 = vpop.xlane.xlu0 %802
        %804 = vmax.xlane.f32.xlu0 %v738
        %v805 = vpop.xlane.xlu0 %804
        %806 = vmax.xlane.f32.xlu0 %v741
        %v807 = vpop.xlane.xlu0 %806
        %808 = vmax.xlane.f32.xlu0 %v746
        %v809 = vpop.xlane.xlu0 %808
        %810 = vmax.xlane.f32.xlu0 %v749
        %v811 = vpop.xlane.xlu0 %810
        %812 = vmax.xlane.f32.xlu0 %v754
        %v813 = vpop.xlane.xlu0 %812
        %814 = vmax.xlane.f32.xlu0 %v757
        %v815 = vpop.xlane.xlu0 %814
        %816 = vmax.xlane.f32.xlu0 %v762
        %v817 = vpop.xlane.xlu0 %816
        %818 = vmax.xlane.f32.xlu0 %v765
        %v819 = vpop.xlane.xlu0 %818
        %820 = vmax.xlane.f32.xlu0 %v770
        %v821 = vpop.xlane.xlu0 %820
        %822 = vmax.xlane.f32.xlu0 %v773
        %v823 = vpop.xlane.xlu0 %822
        %v824 = vmax.f32 %v776, %v793
        %v825 = vmax.f32 %v777, %v795
        %v826 = vmax.f32 %v778, %v797
        %v827 = vmax.f32 %v779, %v799
        %v828 = vmax.f32 %v780, %v801
        %v829 = vmax.f32 %v781, %v803
        %v830 = vmax.f32 %v782, %v805
        %v831 = vmax.f32 %v783, %v807
        %v832 = vmax.f32 %v784, %v809
        %v833 = vmax.f32 %v785, %v811
        %v834 = vmax.f32 %v786, %v813
        %v835 = vmax.f32 %v787, %v815
        %v836 = vmax.f32 %v788, %v817
        %v837 = vmax.f32 %v789, %v819
        %v838 = vmax.f32 %v790, %v821
        %v839 = vmax.f32 %v791, %v823
        %v840 = vsub.f32 %v776, %v824
        %v841 = vsub.f32 %v777, %v825
        %v842 = vsub.f32 %v778, %v826
        %v843 = vsub.f32 %v779, %v827
        %v844 = vsub.f32 %v780, %v828
        %v845 = vsub.f32 %v781, %v829
        %v846 = vsub.f32 %v782, %v830
        %v847 = vsub.f32 %v783, %v831
        %v848 = vsub.f32 %v784, %v832
        %v849 = vsub.f32 %v785, %v833
        %v850 = vsub.f32 %v786, %v834
        %v851 = vsub.f32 %v787, %v835
        %v852 = vsub.f32 %v788, %v836
        %v853 = vsub.f32 %v789, %v837
        %v854 = vsub.f32 %v790, %v838
        %v855 = vsub.f32 %v791, %v839
        %v856 = vmul.f32 %v840, 1.442695
        %v857 = vpow.pop %v856
        %v858 = vmul.f32 %v841, 1.442695
        %v859 = vpow.pop %v858
        %v860 = vmul.f32 %v842, 1.442695
        %v861 = vpow.pop %v860
        %v862 = vmul.f32 %v843, 1.442695
        %v863 = vpow.pop %v862
        %v864 = vmul.f32 %v844, 1.442695
        %v865 = vpow.pop %v864
        %v866 = vmul.f32 %v845, 1.442695
        %v867 = vpow.pop %v866
        %v868 = vmul.f32 %v846, 1.442695
        %v869 = vpow.pop %v868
        %v870 = vmul.f32 %v847, 1.442695
        %v871 = vpow.pop %v870
        %v872 = vmul.f32 %v848, 1.442695
        %v873 = vpow.pop %v872
        %v874 = vmul.f32 %v849, 1.442695
        %v875 = vpow.pop %v874
        %v876 = vmul.f32 %v850, 1.442695
        %v877 = vpow.pop %v876
        %v878 = vmul.f32 %v851, 1.442695
        %v879 = vpow.pop %v878
        %v880 = vmul.f32 %v852, 1.442695
        %v881 = vpow.pop %v880
        %v882 = vmul.f32 %v853, 1.442695
        %v883 = vpow.pop %v882
        %v884 = vmul.f32 %v854, 1.442695
        %v885 = vpow.pop %v884
        %v886 = vmul.f32 %v855, 1.442695
        %v887 = vpow.pop %v886
        %889 = vset.pattern.permute.xlu0 0
        %890 = vperm.xlu0 %889, %v824
        %v891 = vpop.permute.xlu0 %890
        %894 = vset.pattern.permute.xlu0 0
        %895 = vperm.xlu0 %894, %v825
        %v896 = vpop.permute.xlu0 %895
        %899 = vset.pattern.permute.xlu0 0
        %900 = vperm.xlu0 %899, %v826
        %v901 = vpop.permute.xlu0 %900
        %904 = vset.pattern.permute.xlu0 0
        %905 = vperm.xlu0 %904, %v827
        %v906 = vpop.permute.xlu0 %905
        %909 = vset.pattern.permute.xlu0 0
        %910 = vperm.xlu0 %909, %v828
        %v911 = vpop.permute.xlu0 %910
        %914 = vset.pattern.permute.xlu0 0
        %915 = vperm.xlu0 %914, %v829
        %v916 = vpop.permute.xlu0 %915
        %919 = vset.pattern.permute.xlu0 0
        %920 = vperm.xlu0 %919, %v830
        %v921 = vpop.permute.xlu0 %920
        %924 = vset.pattern.permute.xlu0 0
        %925 = vperm.xlu0 %924, %v831
        %v926 = vpop.permute.xlu0 %925
        %929 = vset.pattern.permute.xlu0 0
        %930 = vperm.xlu0 %929, %v832
        %v931 = vpop.permute.xlu0 %930
        %934 = vset.pattern.permute.xlu0 0
        %935 = vperm.xlu0 %934, %v833
        %v936 = vpop.permute.xlu0 %935
        %939 = vset.pattern.permute.xlu0 0
        %940 = vperm.xlu0 %939, %v834
        %v941 = vpop.permute.xlu0 %940
        %944 = vset.pattern.permute.xlu0 0
        %945 = vperm.xlu0 %944, %v835
        %v946 = vpop.permute.xlu0 %945
        %949 = vset.pattern.permute.xlu0 0
        %950 = vperm.xlu0 %949, %v836
        %v951 = vpop.permute.xlu0 %950
        %954 = vset.pattern.permute.xlu0 0
        %955 = vperm.xlu0 %954, %v837
        %v956 = vpop.permute.xlu0 %955
        %959 = vset.pattern.permute.xlu0 0
        %960 = vperm.xlu0 %959, %v838
        %v961 = vpop.permute.xlu0 %960
        %964 = vset.pattern.permute.xlu0 0
        %965 = vperm.xlu0 %964, %v839
        %v966 = vpop.permute.xlu0 %965
        %v968 = vsub.f32 %v714, %v891
        %v969 = vsub.f32 %v717, %v896
        %v970 = vsub.f32 %v722, %v901
        %v971 = vsub.f32 %v725, %v906
        %v972 = vsub.f32 %v730, %v911
        %v973 = vsub.f32 %v733, %v916
        %v974 = vsub.f32 %v738, %v921
        %v975 = vsub.f32 %v741, %v926
        %v976 = vsub.f32 %v746, %v931
        %v977 = vsub.f32 %v749, %v936
        %v978 = vsub.f32 %v754, %v941
        %v979 = vsub.f32 %v757, %v946
        %v980 = vsub.f32 %v762, %v951
        %v981 = vsub.f32 %v765, %v956
        %v982 = vsub.f32 %v770, %v961
        %v983 = vsub.f32 %v773, %v966
        %v984 = vmul.f32 %v968, 1.442695
        %v985 = vpow.pop %v984
        %v986 = vmul.f32 %v969, 1.442695
        %v987 = vpow.pop %v986
        %v988 = vmul.f32 %v970, 1.442695
        %v989 = vpow.pop %v988
        %v990 = vmul.f32 %v971, 1.442695
        %v991 = vpow.pop %v990
        %v992 = vmul.f32 %v972, 1.442695
        %v993 = vpow.pop %v992
        %v994 = vmul.f32 %v973, 1.442695
        %v995 = vpow.pop %v994
        %v996 = vmul.f32 %v974, 1.442695
        %v997 = vpow.pop %v996
        %v998 = vmul.f32 %v975, 1.442695
        %v999 = vpow.pop %v998
        %v1000 = vmul.f32 %v976, 1.442695
        %v1001 = vpow.pop %v1000
        %v1002 = vmul.f32 %v977, 1.442695
        %v1003 = vpow.pop %v1002
        %v1004 = vmul.f32 %v978, 1.442695
        %v1005 = vpow.pop %v1004
        %v1006 = vmul.f32 %v979, 1.442695
        %v1007 = vpow.pop %v1006
        %v1008 = vmul.f32 %v980, 1.442695
        %v1009 = vpow.pop %v1008
        %v1010 = vmul.f32 %v981, 1.442695
        %v1011 = vpow.pop %v1010
        %v1012 = vmul.f32 %v982, 1.442695
        %v1013 = vpow.pop %v1012
        %v1014 = vmul.f32 %v983, 1.442695
        %v1015 = vpow.pop %v1014
        %v1016 = vld [vmem:[#allocation3] sm:$0xff]
        %v1017 = vld [vmem:[#allocation3 + $0x8] sm:$0xff]
        %v1018 = vld [vmem:[#allocation3 + $0x10] sm:$0xff]
        %v1019 = vld [vmem:[#allocation3 + $0x18] sm:$0xff]
        %v1020 = vld [vmem:[#allocation3 + $0x20] sm:$0xff]
        %v1021 = vld [vmem:[#allocation3 + $0x28] sm:$0xff]
        %v1022 = vld [vmem:[#allocation3 + $0x30] sm:$0xff]
        %v1023 = vld [vmem:[#allocation3 + $0x38] sm:$0xff]
        %v1024 = vld [vmem:[#allocation3 + $0x40] sm:$0xff]
        %v1025 = vld [vmem:[#allocation3 + $0x48] sm:$0xff]
        %v1026 = vld [vmem:[#allocation3 + $0x50] sm:$0xff]
        %v1027 = vld [vmem:[#allocation3 + $0x58] sm:$0xff]
        %v1028 = vld [vmem:[#allocation3 + $0x60] sm:$0xff]
        %v1029 = vld [vmem:[#allocation3 + $0x68] sm:$0xff]
        %v1030 = vld [vmem:[#allocation3 + $0x70] sm:$0xff]
        %v1031 = vld [vmem:[#allocation3 + $0x78] sm:$0xff]
        %v1032 = vmul.f32 %v857, %v1016
        %v1033 = vmul.f32 %v859, %v1017
        %v1034 = vmul.f32 %v861, %v1018
        %v1035 = vmul.f32 %v863, %v1019
        %v1036 = vmul.f32 %v865, %v1020
        %v1037 = vmul.f32 %v867, %v1021
        %v1038 = vmul.f32 %v869, %v1022
        %v1039 = vmul.f32 %v871, %v1023
        %v1040 = vmul.f32 %v873, %v1024
        %v1041 = vmul.f32 %v875, %v1025
        %v1042 = vmul.f32 %v877, %v1026
        %v1043 = vmul.f32 %v879, %v1027
        %v1044 = vmul.f32 %v881, %v1028
        %v1045 = vmul.f32 %v883, %v1029
        %v1046 = vmul.f32 %v885, %v1030
        %v1047 = vmul.f32 %v887, %v1031
        %1048 = vadd.xlane.f32.xlu0 %v985
        %v1049 = vpop.xlane.xlu0 %1048
        %1050 = vadd.xlane.f32.xlu0 %v987
        %v1051 = vpop.xlane.xlu0 %1050
        %1052 = vadd.xlane.f32.xlu0 %v989
        %v1053 = vpop.xlane.xlu0 %1052
        %1054 = vadd.xlane.f32.xlu0 %v991
        %v1055 = vpop.xlane.xlu0 %1054
        %1056 = vadd.xlane.f32.xlu0 %v993
        %v1057 = vpop.xlane.xlu0 %1056
        %1058 = vadd.xlane.f32.xlu0 %v995
        %v1059 = vpop.xlane.xlu0 %1058
        %1060 = vadd.xlane.f32.xlu0 %v997
        %v1061 = vpop.xlane.xlu0 %1060
        %1062 = vadd.xlane.f32.xlu0 %v999
        %v1063 = vpop.xlane.xlu0 %1062
        %1064 = vadd.xlane.f32.xlu0 %v1001
        %v1065 = vpop.xlane.xlu0 %1064
        %1066 = vadd.xlane.f32.xlu0 %v1003
        %v1067 = vpop.xlane.xlu0 %1066
        %1068 = vadd.xlane.f32.xlu0 %v1005
        %v1069 = vpop.xlane.xlu0 %1068
        %1070 = vadd.xlane.f32.xlu0 %v1007
        %v1071 = vpop.xlane.xlu0 %1070
        %1072 = vadd.xlane.f32.xlu0 %v1009
        %v1073 = vpop.xlane.xlu0 %1072
        %1074 = vadd.xlane.f32.xlu0 %v1011
        %v1075 = vpop.xlane.xlu0 %1074
        %1076 = vadd.xlane.f32.xlu0 %v1013
        %v1077 = vpop.xlane.xlu0 %1076
        %1078 = vadd.xlane.f32.xlu0 %v1015
        %v1079 = vpop.xlane.xlu0 %1078
        %v1080 = vadd.f32 %v1032, %v1049
        %v1081 = vadd.f32 %v1033, %v1051
        %v1082 = vadd.f32 %v1034, %v1053
        %v1083 = vadd.f32 %v1035, %v1055
        %v1084 = vadd.f32 %v1036, %v1057
        %v1085 = vadd.f32 %v1037, %v1059
        %v1086 = vadd.f32 %v1038, %v1061
        %v1087 = vadd.f32 %v1039, %v1063
        %v1088 = vadd.f32 %v1040, %v1065
        %v1089 = vadd.f32 %v1041, %v1067
        %v1090 = vadd.f32 %v1042, %v1069
        %v1091 = vadd.f32 %v1043, %v1071
        %v1092 = vadd.f32 %v1044, %v1073
        %v1093 = vadd.f32 %v1045, %v1075
        %v1094 = vadd.f32 %v1046, %v1077
        %v1095 = vadd.f32 %v1047, %v1079
        %vm1096 = vcmask 7168
        %1097 = vst.msk [vmem:[#allocation3] sm:$0xff] %vm1096, %v1080
        %1098 = vst.msk [vmem:[#allocation3 + $0x8] sm:$0xff] %vm1096, %v1081
        %1099 = vst.msk [vmem:[#allocation3 + $0x10] sm:$0xff] %vm1096, %v1082
        %1100 = vst.msk [vmem:[#allocation3 + $0x18] sm:$0xff] %vm1096, %v1083
        %1101 = vst.msk [vmem:[#allocation3 + $0x20] sm:$0xff] %vm1096, %v1084
        %1102 = vst.msk [vmem:[#allocation3 + $0x28] sm:$0xff] %vm1096, %v1085
        %1103 = vst.msk [vmem:[#allocation3 + $0x30] sm:$0xff] %vm1096, %v1086
        %1104 = vst.msk [vmem:[#allocation3 + $0x38] sm:$0xff] %vm1096, %v1087
        %1105 = vst.msk [vmem:[#allocation3 + $0x40] sm:$0xff] %vm1096, %v1088
        %1106 = vst.msk [vmem:[#allocation3 + $0x48] sm:$0xff] %vm1096, %v1089
        %1107 = vst.msk [vmem:[#allocation3 + $0x50] sm:$0xff] %vm1096, %v1090
        %1108 = vst.msk [vmem:[#allocation3 + $0x58] sm:$0xff] %vm1096, %v1091
        %1109 = vst.msk [vmem:[#allocation3 + $0x60] sm:$0xff] %vm1096, %v1092
        %1110 = vst.msk [vmem:[#allocation3 + $0x68] sm:$0xff] %vm1096, %v1093
        %1111 = vst.msk [vmem:[#allocation3 + $0x70] sm:$0xff] %vm1096, %v1094
        %1112 = vst.msk [vmem:[#allocation3 + $0x78] sm:$0xff] %vm1096, %v1095
        %v1113 = vld [vmem:[#allocation4] sm:$0xff]
        %v1114 = vld [vmem:[#allocation4 + $0x8] sm:$0xff]
        %v1115 = vld [vmem:[#allocation4 + $0x10] sm:$0xff]
        %v1116 = vld [vmem:[#allocation4 + $0x18] sm:$0xff]
        %v1117 = vld [vmem:[#allocation4 + $0x20] sm:$0xff]
        %v1118 = vld [vmem:[#allocation4 + $0x28] sm:$0xff]
        %v1119 = vld [vmem:[#allocation4 + $0x30] sm:$0xff]
        %v1120 = vld [vmem:[#allocation4 + $0x38] sm:$0xff]
        %v1121 = vld [vmem:[#allocation4 + $0x40] sm:$0xff]
        %v1122 = vld [vmem:[#allocation4 + $0x48] sm:$0xff]
        %v1123 = vld [vmem:[#allocation4 + $0x50] sm:$0xff]
        %v1124 = vld [vmem:[#allocation4 + $0x58] sm:$0xff]
        %v1125 = vld [vmem:[#allocation4 + $0x60] sm:$0xff]
        %v1126 = vld [vmem:[#allocation4 + $0x68] sm:$0xff]
        %v1127 = vld [vmem:[#allocation4 + $0x70] sm:$0xff]
        %v1128 = vld [vmem:[#allocation4 + $0x78] sm:$0xff]
        %1130 = vset.pattern.permute.xlu0 0
        %1131 = vperm.xlu0 %1130, %v857
        %v1132 = vpop.permute.xlu0 %1131
        %1135 = vset.pattern.permute.xlu0 0
        %1136 = vperm.xlu0 %1135, %v859
        %v1137 = vpop.permute.xlu0 %1136
        %1140 = vset.pattern.permute.xlu0 0
        %1141 = vperm.xlu0 %1140, %v861
        %v1142 = vpop.permute.xlu0 %1141
        %1145 = vset.pattern.permute.xlu0 0
        %1146 = vperm.xlu0 %1145, %v863
        %v1147 = vpop.permute.xlu0 %1146
        %1150 = vset.pattern.permute.xlu0 0
        %1151 = vperm.xlu0 %1150, %v865
        %v1152 = vpop.permute.xlu0 %1151
        %1155 = vset.pattern.permute.xlu0 0
        %1156 = vperm.xlu0 %1155, %v867
        %v1157 = vpop.permute.xlu0 %1156
        %1160 = vset.pattern.permute.xlu0 0
        %1161 = vperm.xlu0 %1160, %v869
        %v1162 = vpop.permute.xlu0 %1161
        %1165 = vset.pattern.permute.xlu0 0
        %1166 = vperm.xlu0 %1165, %v871
        %v1167 = vpop.permute.xlu0 %1166
        %1170 = vset.pattern.permute.xlu0 0
        %1171 = vperm.xlu0 %1170, %v873
        %v1172 = vpop.permute.xlu0 %1171
        %1175 = vset.pattern.permute.xlu0 0
        %1176 = vperm.xlu0 %1175, %v875
        %v1177 = vpop.permute.xlu0 %1176
        %1180 = vset.pattern.permute.xlu0 0
        %1181 = vperm.xlu0 %1180, %v877
        %v1182 = vpop.permute.xlu0 %1181
        %1185 = vset.pattern.permute.xlu0 0
        %1186 = vperm.xlu0 %1185, %v879
        %v1187 = vpop.permute.xlu0 %1186
        %1190 = vset.pattern.permute.xlu0 0
        %1191 = vperm.xlu0 %1190, %v881
        %v1192 = vpop.permute.xlu0 %1191
        %1195 = vset.pattern.permute.xlu0 0
        %1196 = vperm.xlu0 %1195, %v883
        %v1197 = vpop.permute.xlu0 %1196
        %1200 = vset.pattern.permute.xlu0 0
        %1201 = vperm.xlu0 %1200, %v885
        %v1202 = vpop.permute.xlu0 %1201
        %1205 = vset.pattern.permute.xlu0 0
        %1206 = vperm.xlu0 %1205, %v887
        %v1207 = vpop.permute.xlu0 %1206
        %v1209 = vmul.f32 %v1132, %v1113
        %v1210 = vmul.f32 %v1137, %v1114
        %v1211 = vmul.f32 %v1142, %v1115
        %v1212 = vmul.f32 %v1147, %v1116
        %v1213 = vmul.f32 %v1152, %v1117
        %v1214 = vmul.f32 %v1157, %v1118
        %v1215 = vmul.f32 %v1162, %v1119
        %v1216 = vmul.f32 %v1167, %v1120
        %v1217 = vmul.f32 %v1172, %v1121
        %v1218 = vmul.f32 %v1177, %v1122
        %v1219 = vmul.f32 %v1182, %v1123
        %v1220 = vmul.f32 %v1187, %v1124
        %v1221 = vmul.f32 %v1192, %v1125
        %v1222 = vmul.f32 %v1197, %v1126
        %v1223 = vmul.f32 %v1202, %v1127
        %v1224 = vmul.f32 %v1207, %v1128
        %v1225 = vpack.c.bf16 %v987, %v985
        %v1226 = vpack.c.bf16 %v991, %v989
        %v1227 = vpack.c.bf16 %v995, %v993
        %v1228 = vpack.c.bf16 %v999, %v997
        %v1229 = vpack.c.bf16 %v1003, %v1001
        %v1230 = vpack.c.bf16 %v1007, %v1005
        %v1231 = vpack.c.bf16 %v1011, %v1009
        %v1232 = vpack.c.bf16 %v1015, %v1013
        %v1233 = vld [vmem:[%s431] sm:$0xf]
        %v1234 = vld [vmem:[%s431 + $0x4] sm:$0xf]
        %v1235 = vld [vmem:[%s431 + $0x8] sm:$0xf]
        %v1236 = vld [vmem:[%s431 + $0xc] sm:$0xf]
        %v1237 = vld [vmem:[%s431 + $0x10] sm:$0xf]
        %v1238 = vld [vmem:[%s431 + $0x14] sm:$0xf]
        %v1239 = vld [vmem:[%s431 + $0x18] sm:$0xf]
        %v1240 = vld [vmem:[%s431 + $0x1c] sm:$0xf]
        %v1241 = vld [vmem:[%s431 + $0x20] sm:$0xf]
        %v1242 = vld [vmem:[%s431 + $0x24] sm:$0xf]
        %v1243 = vld [vmem:[%s431 + $0x28] sm:$0xf]
        %v1244 = vld [vmem:[%s431 + $0x2c] sm:$0xf]
        %v1245 = vld [vmem:[%s431 + $0x30] sm:$0xf]
        %v1246 = vld [vmem:[%s431 + $0x34] sm:$0xf]
        %v1247 = vld [vmem:[%s431 + $0x38] sm:$0xf]
        %v1248 = vld [vmem:[%s431 + $0x3c] sm:$0xf]
        %v1265 = vunpack.c.l.b16 %v1233
        %v1266 = vunpack.c.l.b16 %v1234
        %v1267 = vunpack.c.l.b16 %v1235
        %v1268 = vunpack.c.l.b16 %v1236
        %v1269 = vunpack.c.l.b16 %v1237
        %v1270 = vunpack.c.l.b16 %v1238
        %v1271 = vunpack.c.l.b16 %v1239
        %v1272 = vunpack.c.l.b16 %v1240
        %v1273 = vunpack.c.l.b16 %v1241
        %v1274 = vunpack.c.l.b16 %v1242
        %v1275 = vunpack.c.l.b16 %v1243
        %v1276 = vunpack.c.l.b16 %v1244
        %v1277 = vunpack.c.l.b16 %v1245
        %v1278 = vunpack.c.l.b16 %v1246
        %v1279 = vunpack.c.l.b16 %v1247
        %v1280 = vunpack.c.l.b16 %v1248
        %v1281 = vpack.c.b16 %v1266, %v1265
        %v1282 = vpack.c.b16 %v1268, %v1267
        %v1283 = vpack.c.b16 %v1270, %v1269
        %v1284 = vpack.c.b16 %v1272, %v1271
        %v1285 = vpack.c.b16 %v1274, %v1273
        %v1286 = vpack.c.b16 %v1276, %v1275
        %v1287 = vpack.c.b16 %v1278, %v1277
        %v1288 = vpack.c.b16 %v1280, %v1279
        %1297 = vmatprep.subr.bf16.mxu0 0
        %1298 = vmatpush1.bf16.msra.mxu0 %v1281
        %1299 = vmatprep.subr.bf16.mxu0 0
        %1300 = vmatpush1.bf16.msra.mxu0 %v1282
        %1301 = vmatprep.subr.bf16.mxu0 0
        %1302 = vmatpush1.bf16.msra.mxu0 %v1283
        %1303 = vmatprep.subr.bf16.mxu0 0
        %1304 = vmatpush1.bf16.msra.mxu0 %v1284
        %1305 = vmatprep.subr.bf16.mxu0 0
        %1306 = vmatpush1.bf16.msra.mxu0 %v1285
        %1307 = vmatprep.subr.bf16.mxu0 0
        %1308 = vmatpush1.bf16.msra.mxu0 %v1286
        %1309 = vmatprep.subr.bf16.mxu0 0
        %1310 = vmatpush1.bf16.msra.mxu0 %v1287
        %1311 = vmatprep.subr.bf16.mxu0 0
        %1312 = vmatpush1.bf16.msra.mxu0 %v1288
        %1313 = vmatprep.subr.bf16.mxu0 0
        %1314 = vmatpush1.bf16.msra.mxu0 0
        %1315 = vmatprep.subr.bf16.mxu0 0
        %1316 = vmatpush1.bf16.msra.mxu0 0
        %1317 = vmatprep.subr.bf16.mxu0 0
        %1318 = vmatpush1.bf16.msra.mxu0 0
        %1319 = vmatprep.subr.bf16.mxu0 0
        %1320 = vmatpush1.bf16.msra.mxu0 0
        %1321 = vmatprep.subr.bf16.mxu0 0
        %1322 = vmatpush1.bf16.msra.mxu0 0
        %1323 = vmatprep.subr.bf16.mxu0 0
        %1324 = vmatpush1.bf16.msra.mxu0 0
        %1325 = vmatprep.subr.bf16.mxu0 0
        %1326 = vmatpush1.bf16.msra.mxu0 0
        %1327 = vmatprep.subr.bf16.mxu0 0
        %1328 = vmatpush1.bf16.msra.mxu0 0
        %1329 = vmatprep.mubr.bf16.mxu0 0
        %1330 = vmatmul.mubr.bf16.gmra.mrb[0].mxu0 %v1225
        %v1331 = vpop.f32.mrb[0].mxu0
        %v1332 = vadd.f32 0.0, %v1331
        %v1333 = vpop.f32.mrb[0].mxu0
        %v1334 = vpop.f32.mrb[0].mxu0
        %v1335 = vadd.f32 0.0, %v1334
        %v1336 = vpop.f32.mrb[0].mxu0
        %1337 = vmatprep.mubr.bf16.mxu0 0
        %1338 = vmatmul.mubr.bf16.gmra.mrb[0].mxu0 %v1226
        %v1339 = vpop.f32.mrb[0].mxu0
        %v1340 = vadd.f32 0.0, %v1339
        %v1341 = vpop.f32.mrb[0].mxu0
        %v1342 = vpop.f32.mrb[0].mxu0
        %v1343 = vadd.f32 0.0, %v1342
        %v1344 = vpop.f32.mrb[0].mxu0
        %1345 = vmatprep.mubr.bf16.mxu0 0
        %1346 = vmatmul.mubr.bf16.gmra.mrb[0].mxu0 %v1227
        %v1347 = vpop.f32.mrb[0].mxu0
        %v1348 = vadd.f32 0.0, %v1347
        %v1349 = vpop.f32.mrb[0].mxu0
        %v1350 = vpop.f32.mrb[0].mxu0
        %v1351 = vadd.f32 0.0, %v1350
        %v1352 = vpop.f32.mrb[0].mxu0
        %1353 = vmatprep.mubr.bf16.mxu0 0
        %1354 = vmatmul.mubr.bf16.gmra.mrb[0].mxu0 %v1228
        %v1355 = vpop.f32.mrb[0].mxu0
        %v1356 = vadd.f32 0.0, %v1355
        %v1357 = vpop.f32.mrb[0].mxu0
        %v1358 = vpop.f32.mrb[0].mxu0
        %v1359 = vadd.f32 0.0, %v1358
        %v1360 = vpop.f32.mrb[0].mxu0
        %1361 = vmatprep.mubr.bf16.mxu0 0
        %1362 = vmatmul.mubr.bf16.gmra.mrb[0].mxu0 %v1229
        %v1363 = vpop.f32.mrb[0].mxu0
        %v1364 = vadd.f32 0.0, %v1363
        %v1365 = vpop.f32.mrb[0].mxu0
        %v1366 = vpop.f32.mrb[0].mxu0
        %v1367 = vadd.f32 0.0, %v1366
        %v1368 = vpop.f32.mrb[0].mxu0
        %1369 = vmatprep.mubr.bf16.mxu0 0
        %1370 = vmatmul.mubr.bf16.gmra.mrb[0].mxu0 %v1230
        %v1371 = vpop.f32.mrb[0].mxu0
        %v1372 = vadd.f32 0.0, %v1371
        %v1373 = vpop.f32.mrb[0].mxu0
        %v1374 = vpop.f32.mrb[0].mxu0
        %v1375 = vadd.f32 0.0, %v1374
        %v1376 = vpop.f32.mrb[0].mxu0
        %1377 = vmatprep.mubr.bf16.mxu0 0
        %1378 = vmatmul.mubr.bf16.gmra.mrb[0].mxu0 %v1231
        %v1379 = vpop.f32.mrb[0].mxu0
        %v1380 = vadd.f32 0.0, %v1379
        %v1381 = vpop.f32.mrb[0].mxu0
        %v1382 = vpop.f32.mrb[0].mxu0
        %v1383 = vadd.f32 0.0, %v1382
        %v1384 = vpop.f32.mrb[0].mxu0
        %1385 = vmatprep.mubr.bf16.mxu0 0
        %1386 = vmatmul.mubr.bf16.gmra.mrb[0].mxu0 %v1232
        %v1387 = vpop.f32.mrb[0].mxu0
        %v1388 = vadd.f32 0.0, %v1387
        %v1389 = vpop.f32.mrb[0].mxu0
        %v1390 = vpop.f32.mrb[0].mxu0
        %v1391 = vadd.f32 0.0, %v1390
        %v1392 = vpop.f32.mrb[0].mxu0
        %1393 = vdwg.mxu0
        %v1394 = vadd.f32 %v1209, %v1332
        %v1395 = vadd.f32 %v1210, %v1335
        %v1396 = vadd.f32 %v1211, %v1340
        %v1397 = vadd.f32 %v1212, %v1343
        %v1398 = vadd.f32 %v1213, %v1348
        %v1399 = vadd.f32 %v1214, %v1351
        %v1400 = vadd.f32 %v1215, %v1356
        %v1401 = vadd.f32 %v1216, %v1359
        %v1402 = vadd.f32 %v1217, %v1364
        %v1403 = vadd.f32 %v1218, %v1367
        %v1404 = vadd.f32 %v1219, %v1372
        %v1405 = vadd.f32 %v1220, %v1375
        %v1406 = vadd.f32 %v1221, %v1380
        %v1407 = vadd.f32 %v1222, %v1383
        %v1408 = vadd.f32 %v1223, %v1388
        %v1409 = vadd.f32 %v1224, %v1391
        %1410 = vst [vmem:[#allocation4] sm:$0xff] %v1394
        %1411 = vst [vmem:[#allocation4 + $0x8] sm:$0xff] %v1395
        %1412 = vst [vmem:[#allocation4 + $0x10] sm:$0xff] %v1396
        %1413 = vst [vmem:[#allocation4 + $0x18] sm:$0xff] %v1397
        %1414 = vst [vmem:[#allocation4 + $0x20] sm:$0xff] %v1398
        %1415 = vst [vmem:[#allocation4 + $0x28] sm:$0xff] %v1399
        %1416 = vst [vmem:[#allocation4 + $0x30] sm:$0xff] %v1400
        %1417 = vst [vmem:[#allocation4 + $0x38] sm:$0xff] %v1401
        %1418 = vst [vmem:[#allocation4 + $0x40] sm:$0xff] %v1402
        %1419 = vst [vmem:[#allocation4 + $0x48] sm:$0xff] %v1403
        %1420 = vst [vmem:[#allocation4 + $0x50] sm:$0xff] %v1404
        %1421 = vst [vmem:[#allocation4 + $0x58] sm:$0xff] %v1405
        %1422 = vst [vmem:[#allocation4 + $0x60] sm:$0xff] %v1406
        %1423 = vst [vmem:[#allocation4 + $0x68] sm:$0xff] %v1407
        %1424 = vst [vmem:[#allocation4 + $0x70] sm:$0xff] %v1408
        %1425 = vst [vmem:[#allocation4 + $0x78] sm:$0xff] %v1409
        %1426 = vst.msk [vmem:[#allocation2] sm:$0xff] %vm1096, %v824
        %1427 = vst.msk [vmem:[#allocation2 + $0x8] sm:$0xff] %vm1096, %v825
        %1428 = vst.msk [vmem:[#allocation2 + $0x10] sm:$0xff] %vm1096, %v826
        %1429 = vst.msk [vmem:[#allocation2 + $0x18] sm:$0xff] %vm1096, %v827
        %1430 = vst.msk [vmem:[#allocation2 + $0x20] sm:$0xff] %vm1096, %v828
        %1431 = vst.msk [vmem:[#allocation2 + $0x28] sm:$0xff] %vm1096, %v829
        %1432 = vst.msk [vmem:[#allocation2 + $0x30] sm:$0xff] %vm1096, %v830
        %1433 = vst.msk [vmem:[#allocation2 + $0x38] sm:$0xff] %vm1096, %v831
        %1434 = vst.msk [vmem:[#allocation2 + $0x40] sm:$0xff] %vm1096, %v832
        %1435 = vst.msk [vmem:[#allocation2 + $0x48] sm:$0xff] %vm1096, %v833
        %1436 = vst.msk [vmem:[#allocation2 + $0x50] sm:$0xff] %vm1096, %v834
        %1437 = vst.msk [vmem:[#allocation2 + $0x58] sm:$0xff] %vm1096, %v835
        %1438 = vst.msk [vmem:[#allocation2 + $0x60] sm:$0xff] %vm1096, %v836
        %1439 = vst.msk [vmem:[#allocation2 + $0x68] sm:$0xff] %vm1096, %v837
        %1440 = vst.msk [vmem:[#allocation2 + $0x70] sm:$0xff] %vm1096, %v838
        %1441 = vst.msk [vmem:[#allocation2 + $0x78] sm:$0xff] %vm1096, %v839
        %p1442 = scmp.eq.s32.totalorder %s38, 1
        // Predicated region
        $region77: #{tpu_custom_call.1} parent=51 // pred_check
          %p1443 = pneg %p1442
        $region78: #{tpu_custom_call.1} parent=51 // pred_check_branch
          %1445 = sbr.rel (%p1443) target = $region80
        $region79: #{tpu_custom_call.1} parent=51 // pred_region
          %v1446 = vld [vmem:[#allocation4] sm:$0xff]
          %v1447 = vld [vmem:[#allocation4 + $0x8] sm:$0xff]
          %v1448 = vld [vmem:[#allocation4 + $0x10] sm:$0xff]
          %v1449 = vld [vmem:[#allocation4 + $0x18] sm:$0xff]
          %v1450 = vld [vmem:[#allocation4 + $0x20] sm:$0xff]
          %v1451 = vld [vmem:[#allocation4 + $0x28] sm:$0xff]
          %v1452 = vld [vmem:[#allocation4 + $0x30] sm:$0xff]
          %v1453 = vld [vmem:[#allocation4 + $0x38] sm:$0xff]
          %v1454 = vld [vmem:[#allocation4 + $0x40] sm:$0xff]
          %v1455 = vld [vmem:[#allocation4 + $0x48] sm:$0xff]
          %v1456 = vld [vmem:[#allocation4 + $0x50] sm:$0xff]
          %v1457 = vld [vmem:[#allocation4 + $0x58] sm:$0xff]
          %v1458 = vld [vmem:[#allocation4 + $0x60] sm:$0xff]
          %v1459 = vld [vmem:[#allocation4 + $0x68] sm:$0xff]
          %v1460 = vld [vmem:[#allocation4 + $0x70] sm:$0xff]
          %v1461 = vld [vmem:[#allocation4 + $0x78] sm:$0xff]
          %v1462 = vld [vmem:[#allocation3] sm:$0xff]
          %v1463 = vld [vmem:[#allocation3 + $0x8] sm:$0xff]
          %v1464 = vld [vmem:[#allocation3 + $0x10] sm:$0xff]
          %v1465 = vld [vmem:[#allocation3 + $0x18] sm:$0xff]
          %v1466 = vld [vmem:[#allocation3 + $0x20] sm:$0xff]
          %v1467 = vld [vmem:[#allocation3 + $0x28] sm:$0xff]
          %v1468 = vld [vmem:[#allocation3 + $0x30] sm:$0xff]
          %v1469 = vld [vmem:[#allocation3 + $0x38] sm:$0xff]
          %v1470 = vld [vmem:[#allocation3 + $0x40] sm:$0xff]
          %v1471 = vld [vmem:[#allocation3 + $0x48] sm:$0xff]
          %v1472 = vld [vmem:[#allocation3 + $0x50] sm:$0xff]
          %v1473 = vld [vmem:[#allocation3 + $0x58] sm:$0xff]
          %v1474 = vld [vmem:[#allocation3 + $0x60] sm:$0xff]
          %v1475 = vld [vmem:[#allocation3 + $0x68] sm:$0xff]
          %v1476 = vld [vmem:[#allocation3 + $0x70] sm:$0xff]
          %v1477 = vld [vmem:[#allocation3 + $0x78] sm:$0xff]
          %v1478 = vrcp.pop %v1462
          %v1479 = vrcp.pop %v1463
          %v1480 = vrcp.pop %v1464
          %v1481 = vrcp.pop %v1465
          %v1482 = vrcp.pop %v1466
          %v1483 = vrcp.pop %v1467
          %v1484 = vrcp.pop %v1468
          %v1485 = vrcp.pop %v1469
          %v1486 = vrcp.pop %v1470
          %v1487 = vrcp.pop %v1471
          %v1488 = vrcp.pop %v1472
          %v1489 = vrcp.pop %v1473
          %v1490 = vrcp.pop %v1474
          %v1491 = vrcp.pop %v1475
          %v1492 = vrcp.pop %v1476
          %v1493 = vrcp.pop %v1477
          %1495 = vset.pattern.permute.xlu0 0
          %1496 = vperm.xlu0 %1495, %v1478
          %v1497 = vpop.permute.xlu0 %1496
          %1500 = vset.pattern.permute.xlu0 0
          %1501 = vperm.xlu0 %1500, %v1479
          %v1502 = vpop.permute.xlu0 %1501
          %1505 = vset.pattern.permute.xlu0 0
          %1506 = vperm.xlu0 %1505, %v1480
          %v1507 = vpop.permute.xlu0 %1506
          %1510 = vset.pattern.permute.xlu0 0
          %1511 = vperm.xlu0 %1510, %v1481
          %v1512 = vpop.permute.xlu0 %1511
          %1515 = vset.pattern.permute.xlu0 0
          %1516 = vperm.xlu0 %1515, %v1482
          %v1517 = vpop.permute.xlu0 %1516
          %1520 = vset.pattern.permute.xlu0 0
          %1521 = vperm.xlu0 %1520, %v1483
          %v1522 = vpop.permute.xlu0 %1521
          %1525 = vset.pattern.permute.xlu0 0
          %1526 = vperm.xlu0 %1525, %v1484
          %v1527 = vpop.permute.xlu0 %1526
          %1530 = vset.pattern.permute.xlu0 0
          %1531 = vperm.xlu0 %1530, %v1485
          %v1532 = vpop.permute.xlu0 %1531
          %1535 = vset.pattern.permute.xlu0 0
          %1536 = vperm.xlu0 %1535, %v1486
          %v1537 = vpop.permute.xlu0 %1536
          %1540 = vset.pattern.permute.xlu0 0
          %1541 = vperm.xlu0 %1540, %v1487
          %v1542 = vpop.permute.xlu0 %1541
          %1545 = vset.pattern.permute.xlu0 0
          %1546 = vperm.xlu0 %1545, %v1488
          %v1547 = vpop.permute.xlu0 %1546
          %1550 = vset.pattern.permute.xlu0 0
          %1551 = vperm.xlu0 %1550, %v1489
          %v1552 = vpop.permute.xlu0 %1551
          %1555 = vset.pattern.permute.xlu0 0
          %1556 = vperm.xlu0 %1555, %v1490
          %v1557 = vpop.permute.xlu0 %1556
          %1560 = vset.pattern.permute.xlu0 0
          %1561 = vperm.xlu0 %1560, %v1491
          %v1562 = vpop.permute.xlu0 %1561
          %1565 = vset.pattern.permute.xlu0 0
          %1566 = vperm.xlu0 %1565, %v1492
          %v1567 = vpop.permute.xlu0 %1566
          %1570 = vset.pattern.permute.xlu0 0
          %1571 = vperm.xlu0 %1570, %v1493
          %v1572 = vpop.permute.xlu0 %1571
          %v1574 = vmul.f32 %v1446, %v1497
          %v1575 = vmul.f32 %v1447, %v1502
          %v1576 = vmul.f32 %v1448, %v1507
          %v1577 = vmul.f32 %v1449, %v1512
          %v1578 = vmul.f32 %v1450, %v1517
          %v1579 = vmul.f32 %v1451, %v1522
          %v1580 = vmul.f32 %v1452, %v1527
          %v1581 = vmul.f32 %v1453, %v1532
          %v1582 = vmul.f32 %v1454, %v1537
          %v1583 = vmul.f32 %v1455, %v1542
          %v1584 = vmul.f32 %v1456, %v1547
          %v1585 = vmul.f32 %v1457, %v1552
          %v1586 = vmul.f32 %v1458, %v1557
          %v1587 = vmul.f32 %v1459, %v1562
          %v1588 = vmul.f32 %v1460, %v1567
          %v1589 = vmul.f32 %v1461, %v1572
          %v1590 = vpack.c.bf16 %v1575, %v1574
          %v1591 = vpack.c.bf16 %v1577, %v1576
          %v1592 = vpack.c.bf16 %v1579, %v1578
          %v1593 = vpack.c.bf16 %v1581, %v1580
          %v1594 = vpack.c.bf16 %v1583, %v1582
          %v1595 = vpack.c.bf16 %v1585, %v1584
          %v1596 = vpack.c.bf16 %v1587, %v1586
          %v1597 = vpack.c.bf16 %v1589, %v1588
          %v1598 = vld [vmem:[#allocation13] sm:$0xf]
          %v1599 = vld [vmem:[#allocation13 + $0x4] sm:$0xf]
          %v1600 = vld [vmem:[#allocation13 + $0x8] sm:$0xf]
          %v1601 = vld [vmem:[#allocation13 + $0xc] sm:$0xf]
          %v1602 = vld [vmem:[#allocation13 + $0x10] sm:$0xf]
          %v1603 = vld [vmem:[#allocation13 + $0x14] sm:$0xf]
          %v1604 = vld [vmem:[#allocation13 + $0x18] sm:$0xf]
          %v1605 = vld [vmem:[#allocation13 + $0x1c] sm:$0xf]
          %v1606 = vld [vmem:[#allocation13 + $0x20] sm:$0xf]
          %v1607 = vld [vmem:[#allocation13 + $0x24] sm:$0xf]
          %v1608 = vld [vmem:[#allocation13 + $0x28] sm:$0xf]
          %v1609 = vld [vmem:[#allocation13 + $0x2c] sm:$0xf]
          %v1610 = vld [vmem:[#allocation13 + $0x30] sm:$0xf]
          %v1611 = vld [vmem:[#allocation13 + $0x34] sm:$0xf]
          %v1612 = vld [vmem:[#allocation13 + $0x38] sm:$0xf]
          %v1613 = vld [vmem:[#allocation13 + $0x3c] sm:$0xf]
          %v1614 = vld [vmem:[%s5] sm:$0x1]
          %v1616 = vlaneseq
          %v1617 = vshrl.u32 %v1616, 7
          %v1618 = vsub.s32 0, %v1617
          %v1619 = vrot.slane %v1614, %v1618
          %v1637 = vunpack.c.l.b16 %v1598
          %v1638 = vunpack.c.l.b16 %v1599
          %v1639 = vunpack.c.l.b16 %v1600
          %v1640 = vunpack.c.l.b16 %v1601
          %v1641 = vunpack.c.l.b16 %v1602
          %v1642 = vunpack.c.l.b16 %v1603
          %v1643 = vunpack.c.l.b16 %v1604
          %v1644 = vunpack.c.l.b16 %v1605
          %v1645 = vunpack.c.l.b16 %v1606
          %v1646 = vunpack.c.l.b16 %v1607
          %v1647 = vunpack.c.l.b16 %v1608
          %v1648 = vunpack.c.l.b16 %v1609
          %v1649 = vunpack.c.l.b16 %v1610
          %v1650 = vunpack.c.l.b16 %v1611
          %v1651 = vunpack.c.l.b16 %v1612
          %v1652 = vunpack.c.l.b16 %v1613
          %v1653 = vpack.c.b16 %v1638, %v1637
          %v1654 = vpack.c.b16 %v1640, %v1639
          %v1655 = vpack.c.b16 %v1642, %v1641
          %v1656 = vpack.c.b16 %v1644, %v1643
          %v1657 = vpack.c.b16 %v1646, %v1645
          %v1658 = vpack.c.b16 %v1648, %v1647
          %v1659 = vpack.c.b16 %v1650, %v1649
          %v1660 = vpack.c.b16 %v1652, %v1651
          %1669 = vmatprep.subr.bf16.mxu0 0
          %1670 = vmatpush1.bf16.msra.mxu0 %v1653
          %1671 = vmatprep.subr.bf16.mxu0 0
          %1672 = vmatpush1.bf16.msra.mxu0 %v1654
          %1673 = vmatprep.subr.bf16.mxu0 0
          %1674 = vmatpush1.bf16.msra.mxu0 %v1655
          %1675 = vmatprep.subr.bf16.mxu0 0
          %1676 = vmatpush1.bf16.msra.mxu0 %v1656
          %1677 = vmatprep.subr.bf16.mxu0 0
          %1678 = vmatpush1.bf16.msra.mxu0 %v1657
          %1679 = vmatprep.subr.bf16.mxu0 0
          %1680 = vmatpush1.bf16.msra.mxu0 %v1658
          %1681 = vmatprep.subr.bf16.mxu0 0
          %1682 = vmatpush1.bf16.msra.mxu0 %v1659
          %1683 = vmatprep.subr.bf16.mxu0 0
          %1684 = vmatpush1.bf16.msra.mxu0 %v1660
          %1685 = vmatprep.subr.bf16.mxu0 0
          %1686 = vmatpush1.bf16.msra.mxu0 0
          %1687 = vmatprep.subr.bf16.mxu0 0
          %1688 = vmatpush1.bf16.msra.mxu0 0
          %1689 = vmatprep.subr.bf16.mxu0 0
          %1690 = vmatpush1.bf16.msra.mxu0 0
          %1691 = vmatprep.subr.bf16.mxu0 0
          %1692 = vmatpush1.bf16.msra.mxu0 0
          %1693 = vmatprep.subr.bf16.mxu0 0
          %1694 = vmatpush1.bf16.msra.mxu0 0
          %1695 = vmatprep.subr.bf16.mxu0 0
          %1696 = vmatpush1.bf16.msra.mxu0 0
          %1697 = vmatprep.subr.bf16.mxu0 0
          %1698 = vmatpush1.bf16.msra.mxu0 0
          %1699 = vmatprep.subr.bf16.mxu0 0
          %1700 = vmatpush1.bf16.msra.mxu0 0
          %1701 = vmatprep.mubr.bf16.mxu0 0
          %1702 = vmatmul.mubr.bf16.gmra.mrb[0].mxu0 %v1590
          %v1703 = vpop.f32.mrb[0].mxu0
          %v1704 = vadd.f32 %v1619, %v1703
          %v1705 = vpop.f32.mrb[0].mxu0
          %v1706 = vpop.f32.mrb[0].mxu0
          %v1707 = vadd.f32 %v1619, %v1706
          %v1708 = vpop.f32.mrb[0].mxu0
          %1709 = vmatprep.mubr.bf16.mxu0 0
          %1710 = vmatmul.mubr.bf16.gmra.mrb[0].mxu0 %v1591
          %v1711 = vpop.f32.mrb[0].mxu0
          %v1712 = vadd.f32 %v1619, %v1711
          %v1713 = vpop.f32.mrb[0].mxu0
          %v1714 = vpop.f32.mrb[0].mxu0
          %v1715 = vadd.f32 %v1619, %v1714
          %v1716 = vpop.f32.mrb[0].mxu0
          %1717 = vmatprep.mubr.bf16.mxu0 0
          %1718 = vmatmul.mubr.bf16.gmra.mrb[0].mxu0 %v1592
          %v1719 = vpop.f32.mrb[0].mxu0
          %v1720 = vadd.f32 %v1619, %v1719
          %v1721 = vpop.f32.mrb[0].mxu0
          %v1722 = vpop.f32.mrb[0].mxu0
          %v1723 = vadd.f32 %v1619, %v1722
          %v1724 = vpop.f32.mrb[0].mxu0
          %1725 = vmatprep.mubr.bf16.mxu0 0
          %1726 = vmatmul.mubr.bf16.gmra.mrb[0].mxu0 %v1593
          %v1727 = vpop.f32.mrb[0].mxu0
          %v1728 = vadd.f32 %v1619, %v1727
          %v1729 = vpop.f32.mrb[0].mxu0
          %v1730 = vpop.f32.mrb[0].mxu0
          %v1731 = vadd.f32 %v1619, %v1730
          %v1732 = vpop.f32.mrb[0].mxu0
          %1733 = vmatprep.mubr.bf16.mxu0 0
          %1734 = vmatmul.mubr.bf16.gmra.mrb[0].mxu0 %v1594
          %v1735 = vpop.f32.mrb[0].mxu0
          %v1736 = vadd.f32 %v1619, %v1735
          %v1737 = vpop.f32.mrb[0].mxu0
          %v1738 = vpop.f32.mrb[0].mxu0
          %v1739 = vadd.f32 %v1619, %v1738
          %v1740 = vpop.f32.mrb[0].mxu0
          %1741 = vmatprep.mubr.bf16.mxu0 0
          %1742 = vmatmul.mubr.bf16.gmra.mrb[0].mxu0 %v1595
          %v1743 = vpop.f32.mrb[0].mxu0
          %v1744 = vadd.f32 %v1619, %v1743
          %v1745 = vpop.f32.mrb[0].mxu0
          %v1746 = vpop.f32.mrb[0].mxu0
          %v1747 = vadd.f32 %v1619, %v1746
          %v1748 = vpop.f32.mrb[0].mxu0
          %1749 = vmatprep.mubr.bf16.mxu0 0
          %1750 = vmatmul.mubr.bf16.gmra.mrb[0].mxu0 %v1596
          %v1751 = vpop.f32.mrb[0].mxu0
          %v1752 = vadd.f32 %v1619, %v1751
          %v1753 = vpop.f32.mrb[0].mxu0
          %v1754 = vpop.f32.mrb[0].mxu0
          %v1755 = vadd.f32 %v1619, %v1754
          %v1756 = vpop.f32.mrb[0].mxu0
          %1757 = vmatprep.mubr.bf16.mxu0 0
          %1758 = vmatmul.mubr.bf16.gmra.mrb[0].mxu0 %v1597
          %v1759 = vpop.f32.mrb[0].mxu0
          %v1760 = vadd.f32 %v1619, %v1759
          %v1761 = vpop.f32.mrb[0].mxu0
          %v1762 = vpop.f32.mrb[0].mxu0
          %v1763 = vadd.f32 %v1619, %v1762
          %v1764 = vpop.f32.mrb[0].mxu0
          %1765 = vdwg.mxu0
          %v1766 = vld [vmem:[%s6] sm:$0x1]
          %v1768 = vlaneseq
          %v1769 = vshrl.u32 %v1768, 7
          %v1770 = vsub.s32 0, %v1769
          %v1771 = vrot.slane %v1766, %v1770
          %v1773 = vmul.f32 %v1704, %v1771
          %v1774 = vmul.f32 %v1707, %v1771
          %v1775 = vmul.f32 %v1712, %v1771
          %v1776 = vmul.f32 %v1715, %v1771
          %v1777 = vmul.f32 %v1720, %v1771
          %v1778 = vmul.f32 %v1723, %v1771
          %v1779 = vmul.f32 %v1728, %v1771
          %v1780 = vmul.f32 %v1731, %v1771
          %v1781 = vmul.f32 %v1736, %v1771
          %v1782 = vmul.f32 %v1739, %v1771
          %v1783 = vmul.f32 %v1744, %v1771
          %v1784 = vmul.f32 %v1747, %v1771
          %v1785 = vmul.f32 %v1752, %v1771
          %v1786 = vmul.f32 %v1755, %v1771
          %v1787 = vmul.f32 %v1760, %v1771
          %v1788 = vmul.f32 %v1763, %v1771
          %v1789 = vld [vmem:[%s7] sm:$0x1]
          %v1791 = vlaneseq
          %v1792 = vshrl.u32 %v1791, 7
          %v1793 = vsub.s32 0, %v1792
          %v1794 = vrot.slane %v1789, %v1793
          %v1796 = vadd.f32 %v1773, %v1794
          %v1797 = vadd.f32 %v1774, %v1794
          %v1798 = vadd.f32 %v1775, %v1794
          %v1799 = vadd.f32 %v1776, %v1794
          %v1800 = vadd.f32 %v1777, %v1794
          %v1801 = vadd.f32 %v1778, %v1794
          %v1802 = vadd.f32 %v1779, %v1794
          %v1803 = vadd.f32 %v1780, %v1794
          %v1804 = vadd.f32 %v1781, %v1794
          %v1805 = vadd.f32 %v1782, %v1794
          %v1806 = vadd.f32 %v1783, %v1794
          %v1807 = vadd.f32 %v1784, %v1794
          %v1808 = vadd.f32 %v1785, %v1794
          %v1809 = vadd.f32 %v1786, %v1794
          %v1810 = vadd.f32 %v1787, %v1794
          %v1811 = vadd.f32 %v1788, %v1794
          %v1812 = vld [vmem:[%s440] sm:$0xff]
          %v1813 = vld [vmem:[%s440 + $0x8] sm:$0xff]
          %v1814 = vld [vmem:[%s440 + $0x10] sm:$0xff]
          %v1815 = vld [vmem:[%s440 + $0x18] sm:$0xff]
          %v1816 = vld [vmem:[%s440 + $0x20] sm:$0xff]
          %v1817 = vld [vmem:[%s440 + $0x28] sm:$0xff]
          %v1818 = vld [vmem:[%s440 + $0x30] sm:$0xff]
          %v1819 = vld [vmem:[%s440 + $0x38] sm:$0xff]
          %v1820 = vld [vmem:[%s440 + $0x40] sm:$0xff]
          %v1821 = vld [vmem:[%s440 + $0x48] sm:$0xff]
          %v1822 = vld [vmem:[%s440 + $0x50] sm:$0xff]
          %v1823 = vld [vmem:[%s440 + $0x58] sm:$0xff]
          %v1824 = vld [vmem:[%s440 + $0x60] sm:$0xff]
          %v1825 = vld [vmem:[%s440 + $0x68] sm:$0xff]
          %v1826 = vld [vmem:[%s440 + $0x70] sm:$0xff]
          %v1827 = vld [vmem:[%s440 + $0x78] sm:$0xff]
          %v1828 = vadd.f32 %v1812, %v1796
          %v1829 = vadd.f32 %v1813, %v1797
          %v1830 = vadd.f32 %v1814, %v1798
          %v1831 = vadd.f32 %v1815, %v1799
          %v1832 = vadd.f32 %v1816, %v1800
          %v1833 = vadd.f32 %v1817, %v1801
          %v1834 = vadd.f32 %v1818, %v1802
          %v1835 = vadd.f32 %v1819, %v1803
          %v1836 = vadd.f32 %v1820, %v1804
          %v1837 = vadd.f32 %v1821, %v1805
          %v1838 = vadd.f32 %v1822, %v1806
          %v1839 = vadd.f32 %v1823, %v1807
          %v1840 = vadd.f32 %v1824, %v1808
          %v1841 = vadd.f32 %v1825, %v1809
          %v1842 = vadd.f32 %v1826, %v1810
          %v1843 = vadd.f32 %v1827, %v1811
          %1844 = vst [vmem:[%s491] sm:$0xff] %v1828
          %1845 = vst [vmem:[%s491 + $0x8] sm:$0xff] %v1829
          %1846 = vst [vmem:[%s491 + $0x10] sm:$0xff] %v1830
          %1847 = vst [vmem:[%s491 + $0x18] sm:$0xff] %v1831
          %1848 = vst [vmem:[%s491 + $0x20] sm:$0xff] %v1832
          %1849 = vst [vmem:[%s491 + $0x28] sm:$0xff] %v1833
          %1850 = vst [vmem:[%s491 + $0x30] sm:$0xff] %v1834
          %1851 = vst [vmem:[%s491 + $0x38] sm:$0xff] %v1835
          %1852 = vst [vmem:[%s491 + $0x40] sm:$0xff] %v1836
          %1853 = vst [vmem:[%s491 + $0x48] sm:$0xff] %v1837
          %1854 = vst [vmem:[%s491 + $0x50] sm:$0xff] %v1838
          %1855 = vst [vmem:[%s491 + $0x58] sm:$0xff] %v1839
          %1856 = vst [vmem:[%s491 + $0x60] sm:$0xff] %v1840
          %1857 = vst [vmem:[%s491 + $0x68] sm:$0xff] %v1841
          %1858 = vst [vmem:[%s491 + $0x70] sm:$0xff] %v1842
          %1859 = vst [vmem:[%s491 + $0x78] sm:$0xff] %v1843
        $region80: #{tpu_custom_call.1} parent=51 // pred_fallthru
          _
        %s1860 = sand.u32 %s256, 1
        %s1861 = scalar_lea.sflag [#allocation7], %s1860
        %s1862 = sand.u32 %s256, 1
        %s1863 = smul.addr %s1862, 128
        %s1864 = scalar_lea.vmem [#allocation14], %s1863
        // Predicated region
        $region81: #{tpu_custom_call.1} parent=51 // pred_check
          %p1865 = pneg %p266
        $region82: #{tpu_custom_call.1} parent=51 // pred_check_branch
          %1867 = sbr.rel (%p1865) target = $region84
        $region83: #{tpu_custom_call.1} parent=51 // pred_region
          %s1868 = smul.u32 16, %s37
          %s1870 = ssub.s32 2048, 2048
          %1871 = vsyncadd %s1861, %s1870
          %s1872 = smul.addr %s36, 32
          %s1873 = sadd.s32 %s1868, %s1872
          %s1874 = smul.addr %s1873, 128
          %s1875 = scalar_lea.hbm %s8, %s1874
          %s1876 = sshll.u32 %s1864, 4
          %s1877 = int_to_ptr.vmem [resolvable:$true] %s1876
          %1882 = dma.vmem_to_hbm [thread:$0]  %s1877, 2048, %s1875, %s1861, 128, 128, 8
        $region84: #{tpu_custom_call.1} parent=51 // pred_fallthru
          _
      $region52: #{tpu_custom_call.1} parent=5 // pred_fallthru
        _
      %p1883 = scmp.le.s32.totalorder 2, %s26
      // Predicated region
      $region85: #{tpu_custom_call.1} parent=5 // pred_check
        %p1884 = pneg %p1883
      $region86: #{tpu_custom_call.1} parent=5 // pred_check_branch
        %1886 = sbr.rel (%p1884) target = $region88
      $region87: #{tpu_custom_call.1} parent=5 // pred_region
        %s1887 = ssub.s32 %s26, 2
        // Predicated region
        $region89: #{tpu_custom_call.1} parent=87 // pred_check
          %p1888 = pneg %p272
        $region90: #{tpu_custom_call.1} parent=87 // pred_check_branch
          %1890 = sbr.rel (%p1888) target = $region92
        $region91: #{tpu_custom_call.1} parent=87 // pred_region
          %s1891 = sand.u32 %s257, 1
          %s1892 = scalar_lea.sflag [#allocation7], %s1891
          %s1893 = sand.u32 %s257, 1
          %s1894 = smul.addr %s1893, 128
          %s1895 = scalar_lea.vmem [#allocation14], %s1894
          %1896 = dma.done %s1892, 2048
        $region92: #{tpu_custom_call.1} parent=87 // pred_fallthru
          _
      $region88: #{tpu_custom_call.1} parent=5 // pred_fallthru
        _
    $region6: #{tpu_custom_call.1} parent=1 // loop_footer
      %s30 = sadd.s32 1, %s26
    $region7: #{tpu_custom_call.1} parent=1 // loop_footer_branch
      %25 = sbr.rel target = $region3
    $region8: #{tpu_custom_call.1} parent=1 // loop_exit
      _
    %1897 = vsyncpa [#allocation6], 1
    %s1898 = scalar_lea.sflag [#allocation6], 1
    %1899 = vsyncpa %s1898, 1
    %1900 = vsyncpa [#allocation9], 1
    %s1901 = scalar_lea.sflag [#allocation9], 1
    %1902 = vsyncpa %s1901, 1
    %1903 = vsyncpa [#allocation12], 1
    %s1904 = scalar_lea.sflag [#allocation12], 1
    %1905 = vsyncpa %s1904, 1
    %1906 = vsyncpa [#allocation7], 1
    %s1907 = scalar_lea.sflag [#allocation7], 1
    %1908 = vsyncpa %s1907, 1

</llo_original>
